<compile_context>
chip_gen: v5e
topology: v5e:2x2
jax: 0.10.0
libtpu: 0.0.40
codegen_flags: <defaults>
</compile_context>

<pallas_src>
import numpy as np
import jax
import jax.numpy as jnp
from jax import lax
from jax.experimental import pallas as pl
from jax.experimental.pallas import tpu as pltpu


# ----------------------------------------------------------------------------
# Bidirectional LSTM recurrence: one Pallas kernel per layer,
# grid = (direction, time_chunk)
# ----------------------------------------------------------------------------
def _make_blstm_kernel(Tc, NC, Bk, H, cdt):
    """One (direction, time-chunk) grid step.

    grid axis 0: direction (0 = forward, 1 = backward)  -> "parallel"
    grid axis 1: time chunk                              -> "arbitrary" (h/c carry)
    """

    def kernel(lens_ref, x_ref, wih_ref, whh_ref, b_ref, out_ref,
               h_scr, c_scr, gx_scr):
        d = pl.program_id(0)           # 0 = forward, 1 = backward
        ci = pl.program_id(1)          # sequential chunk counter for this direction

        @pl.when(ci == 0)
        def _():
            h_scr[...] = jnp.zeros_like(h_scr)
            c_scr[...] = jnp.zeros_like(c_scr)

        # Fused input projection (#1): one (Tc*B, D) @ (D, 4H) MXU matmul per
        # chunk, f32 accumulation, result kept in VMEM scratch.
        gx_scr[...] = jnp.dot(x_ref[...], wih_ref[...],
                              preferred_element_type=jnp.float32)

        lens = lens_ref[...]                       # (B, 1) int32, VMEM-resident
        bias = b_ref[...]                          # (1, 4H) f32, resident
        cb = ci + d * (NC - 1 - 2 * ci)            # global time-chunk this step covers

        def step(j, carry):
            row = j + d * (Tc - 1 - 2 * j)         # fwd: j ; bwd: Tc-1-j
            t = cb * Tc + row                      # global time index (masking)

            # Dense per-direction recurrent matmul (#3): (B, H) @ (H, 4H).
            rec = jnp.dot(h_scr[...].astype(cdt), whh_ref[...],
                          preferred_element_type=jnp.float32)      # (B, 4H)

            r0 = pl.multiple_of(row * Bk, Bk)
            g = gx_scr[pl.ds(r0, Bk), :] + rec + bias

            # PyTorch gate order: i, f, g, o (lane-aligned slices; H % 128 == 0)
            i = jax.nn.sigmoid(g[:, 0:H])
            f = jax.nn.sigmoid(g[:, H:2 * H])
            gg = jnp.tanh(g[:, 2 * H:3 * H])
            o = jax.nn.sigmoid(g[:, 3 * H:4 * H])
            c_new = f * c_scr[...] + i * gg
            h_new = o * jnp.tanh(c_new)

            valid = lens > t                       # (B, 1) packed-seq mask
            h_scr[...] = jnp.where(valid, h_new, h_scr[...])
            c_scr[...] = jnp.where(valid, c_new, c_scr[...])
            # fwd -> feature block 0, bwd -> feature block 1 of ONE output (#8);
            # HBM writeback is one DMA per (Tc, B, H) block.
            out_ref[row] = jnp.where(valid, h_new, 0.0).astype(out_ref.dtype)
            return carry

        # Full unroll: gives the LLO scheduler the whole chunk. Drop to 2-4
        # if a bundle dump shows vreg spills (perf-review item #10).
        lax.fori_loop(0, Tc, step, 0, unroll=True)

    return kernel


def blstm_pallas(x, lens, params, *, time_chunk=16, compute_dtype=jnp.bfloat16):
    """Bidirectional LSTM over padded (T, B, D) with packed-sequence masking.

    params = [fwd, bwd], each dict with w_ih_t (D, 4H), w_hh_t (H, 4H), b (1, 4H).
    Returns (T, B, 2H) f32 = concat(forward, backward), zeros at t >= lens[b].
    """
    T, B, D = x.shape
    H = params[0]["w_hh_t"].shape[0]
    # The fused [fwd | bwd] output layout writes H-wide feature blocks of a
    # (.., 2H) array -> H must be a lane-tile multiple (PyTorch default 256 is).
    assert H % 128 == 0, "hidden_dim must be a multiple of 128 for this kernel"

    cdt = jnp.dtype(compute_dtype)
    # Batch padding to a full sublane tile (#5); padded rows get lens = 0.
    bmult = 8 if cdt.itemsize >= 4 else 16
    B_pad = ((B + bmult - 1) // bmult) * bmult

    Tc = min(int(time_chunk), T)
    T_pad = ((T + Tc - 1) // Tc) * Tc
    NC = T_pad // Tc

    xp = x
    if (T_pad, B_pad) != (T, B):
        xp = jnp.pad(x, ((0, T_pad - T), (0, B_pad - B), (0, 0)))
    # Free row-major reshape: the kernel sees one 2-D (Tc*B, D) slab per chunk,
    # so the fused projection is a single well-shaped MXU matmul.
    xp = xp.reshape(NC, Tc * B_pad, D).astype(cdt)

    lens_p = lens.astype(jnp.int32)
    if B_pad != B:
        lens_p = jnp.pad(lens_p, (0, B_pad - B))   # padded rows: len 0 -> stay zero
    lens_p = lens_p.reshape(B_pad, 1)

    # Per-direction weights stacked on a leading axis; bf16 streams (#2) halve
    # weight VMEM + HBM traffic. Accumulation and gate math remain f32.
    w_ih = jnp.stack([params[0]["w_ih_t"], params[1]["w_ih_t"]]).astype(cdt)   # (2, D, 4H)
    w_hh = jnp.stack([params[0]["w_hh_t"], params[1]["w_hh_t"]]).astype(cdt)   # (2, H, 4H)
    bias = jnp.stack([params[0]["b"], params[1]["b"]]).astype(jnp.float32)     # (2, 1, 4H)

    out = pl.pallas_call(
        _make_blstm_kernel(Tc, NC, B_pad, H, cdt),
        out_shape=jax.ShapeDtypeStruct((T_pad, B_pad, 2 * H), jnp.float32),
        grid=(2, NC),
        in_specs=[
            pl.BlockSpec((B_pad, 1), lambda d, c: (0, 0)),            # lens (resident)
            pl.BlockSpec((None, Tc * B_pad, D),                       # x chunk, direction-ordered
                         lambda d, c: (c + d * (NC - 1 - 2 * c), 0, 0)),
            pl.BlockSpec((None, D, 4 * H), lambda d, c: (d, 0, 0)),   # W_ih^T for this direction
            pl.BlockSpec((None, H, 4 * H), lambda d, c: (d, 0, 0)),   # W_hh^T for this direction
            pl.BlockSpec((None, 1, 4 * H), lambda d, c: (d, 0, 0)),   # bias   for this direction
        ],
        # Single output: fwd writes feature block 0, bwd writes feature block 1.
        out_specs=pl.BlockSpec((Tc, B_pad, H),
                               lambda d, c: (c + d * (NC - 1 - 2 * c), 0, d)),
        scratch_shapes=[
            pltpu.VMEM((B_pad, H), jnp.float32),             # h state (f32 carry)
            pltpu.VMEM((B_pad, H), jnp.float32),             # c state (f32 carry)
            pltpu.VMEM((Tc * B_pad, 4 * H), jnp.float32),    # gates_x for current chunk
        ],
        compiler_params=pltpu.CompilerParams(
            # direction axis: independent -> split across TensorCores on v7x (#4)
            # time-chunk axis: carries h/c state -> arbitrary
            dimension_semantics=("parallel", "arbitrary"),
            vmem_limit_bytes=32 * 1024 * 1024),              # explicit (v5e default is 16 MiB)
    )(lens_p, xp, w_ih, w_hh, bias)

    if (T_pad, B_pad) != (T, B):
        out = out[:T, :B]
    return out


# ----------------------------------------------------------------------------
# SequencePooling: reshape + feature-axis concat (no full-tensor transposes)
# ----------------------------------------------------------------------------
def seq_pool(x, lens):
    """(T, B, F) -> (T//2, B, 2F); lens -> lens // 2 (drops trailing odd frame)."""
    T, B, F = x.shape
    T2 = T // 2
    x = x[: 2 * T2].reshape(T2, 2, B, F)
    x = jnp.concatenate([x[:, 0], x[:, 1]], axis=-1)
    return x, lens // 2


# ----------------------------------------------------------------------------
# Listener forward
# ----------------------------------------------------------------------------
def listener_forward(x, lens, all_params, blstm_fn):
    x, lens = seq_pool(x, lens)              # SeqPool0:  40 -> 80 feats
    x = blstm_fn(x, lens, all_params[0])     # BLSTM0:    80 -> 2H
    x, lens = seq_pool(x, lens)              # SeqPool1:  2H -> 4H
    x = blstm_fn(x, lens, all_params[1])     # BLSTM1:    4H -> 2H
    x, lens = seq_pool(x, lens)              # SeqPool2:  2H -> 4H
    x = blstm_fn(x, lens, all_params[2])     # BLSTM2:    4H -> 2H
    return x, lens                           # == pad_packed_sequence output


# ----------------------------------------------------------------------------
# Pure-JAX reference (for correctness check)
# ----------------------------------------------------------------------------
def _ref_lstm_direction(x, lens, w_ih_t, w_hh_t, b, *, reverse):
    T, B, D = x.shape
    H = w_hh_t.shape[0]
    ts = jnp.arange(T)
    if reverse:
        ts = ts[::-1]

    def step(carry, t):
        h, c = carry
        gates = x[t] @ w_ih_t + h @ w_hh_t + b
        i = jax.nn.sigmoid(gates[:, 0:H])
        f = jax.nn.sigmoid(gates[:, H:2 * H])
        g = jnp.tanh(gates[:, 2 * H:3 * H])
        o = jax.nn.sigmoid(gates[:, 3 * H:4 * H])
        c_new = f * c + i * g
        h_new = o * jnp.tanh(c_new)
        mask = (lens > t)[:, None]
        h = jnp.where(mask, h_new, h)
        c = jnp.where(mask, c_new, c)
        return (h, c), jnp.where(mask, h_new, 0.0)

    zeros = jnp.zeros((B, H), jnp.float32)
    _, outs = lax.scan(step, (zeros, zeros), ts)
    return outs[::-1] if reverse else outs


def blstm_ref(x, lens, params):
    fwd = _ref_lstm_direction(
        x, lens, params[0]["w_ih_t"], params[0]["w_hh_t"], params[0]["b"],
        reverse=False)
    bwd = _ref_lstm_direction(
        x, lens, params[1]["w_ih_t"], params[1]["w_hh_t"], params[1]["b"],
        reverse=True)
    return jnp.concatenate([fwd, bwd], axis=-1)


# ----------------------------------------------------------------------------
# Deterministic parameter init (same scheme as nn.LSTM: U(-1/sqrt(H), 1/sqrt(H)))
# ----------------------------------------------------------------------------
def init_blstm(key, input_dim, H):
    k = 1.0 / float(np.sqrt(H))
    keys = jax.random.split(key, 8)
    params = []
    for d in range(2):  # 0 = forward, 1 = backward
        w_ih = jax.random.uniform(keys[4 * d + 0], (4 * H, input_dim),
                                  minval=-k, maxval=k, dtype=jnp.float32)
        w_hh = jax.random.uniform(keys[4 * d + 1], (4 * H, H),
                                  minval=-k, maxval=k, dtype=jnp.float32)
        b_ih = jax.random.uniform(keys[4 * d + 2], (4 * H,),
                                  minval=-k, maxval=k, dtype=jnp.float32)
        b_hh = jax.random.uniform(keys[4 * d + 3], (4 * H,),
                                  minval=-k, maxval=k, dtype=jnp.float32)
        params.append(dict(w_ih_t=w_ih.T, w_hh_t=w_hh.T,
                           b=(b_ih + b_hh)[None, :]))
    return params


# ----------------------------------------------------------------------------
if __name__ == "__main__":
    # Input feature dim must be 40 (SeqPool0 doubles it to 80 = BLSTM0 input).
    # hidden_dim = 128: smallest lane-tile multiple (PyTorch default is 256).
    B, T, FEAT, H = 2, 32, 40, 128

    key = jax.random.PRNGKey(0)
    kx, k0, k1, k2 = jax.random.split(key, 4)

    x = jax.random.normal(kx, (T, B, FEAT), dtype=jnp.float32)
    lens = jnp.array([32, 24], dtype=jnp.int32)      # sorted descending, like packed seqs
    # Zero out padding frames, exactly like pad_packed_sequence would give us.
    pad_mask = (jnp.arange(T)[:, None] < lens[None, :])[:, :, None]
    x = jnp.where(pad_mask, x, 0.0)

    all_params = [
        init_blstm(k0, 2 * FEAT, H),   # BLSTM0: input 80
        init_blstm(k1, 4 * H, H),      # BLSTM1: input 4H
        init_blstm(k2, 4 * H, H),      # BLSTM2: input 4H
    ]

    # Pure-JAX reference with the same packed-sequence semantics.
    ref, ref_lens = listener_forward(x, lens, all_params, blstm_ref)
    ref = np.asarray(jax.block_until_ready(ref))

    # --- f32 path (time_chunk=4 exercises the multi-chunk state carry) -------
    f32_fn = lambda xx, ll, pp: blstm_pallas(xx, ll, pp, time_chunk=4,
                                             compute_dtype=jnp.float32)
    out32, out_lens = listener_forward(x, lens, all_params, f32_fn)
    out32 = np.asarray(jax.block_until_ready(out32))

    assert out32.shape == (T // 8, B, 2 * H), out32.shape
    assert np.array_equal(np.asarray(out_lens), np.asarray(lens) // 8)
    assert np.all(np.isfinite(out32))
    # Packed-sequence padding positions must be EXACTLY zero (precision independent).
    pad_pos = np.arange(T // 8)[:, None] >= np.asarray(out_lens)[None, :]
    assert np.all(out32[pad_pos] == 0.0)
    # NOTE: TPU default f32 matmul precision may use bf16 MXU passes on either
    # side (XLA reference vs Mosaic kernel), so a 1e-5 cross-check would require
    # forcing precision=HIGHEST everywhere; 2e-2 still catches indexing /
    # masking / gate-order bugs, which produce O(0.1 - 1) errors.
    assert np.allclose(out32, ref, atol=2e-2, rtol=2e-2), \
        float(np.max(np.abs(out32 - ref)))

    # --- bf16 production path (bf16 streams/weights, f32 state & gate math) --
    bf16_fn = lambda xx, ll, pp: blstm_pallas(xx, ll, pp, time_chunk=8,
                                              compute_dtype=jnp.bfloat16)
    out16, _ = listener_forward(x, lens, all_params, bf16_fn)
    out16 = np.asarray(jax.block_until_ready(out16))
    assert np.all(np.isfinite(out16))
    assert np.all(out16[pad_pos] == 0.0)
    assert np.allclose(out16, ref, atol=6e-2, rtol=6e-2), \
        float(np.max(np.abs(out16 - ref)))

    # TODO(synk): PackedSequence is a container type with no Pallas equivalent;
    # it is emulated via padded tensors + per-sequence length masking (same outputs).
    print("KERNEL_OK")
</pallas_src>

<mosaic_0001>
module attributes {stable_mosaic.version = 11 : i64} {
  func.func @kernel(%arg0: i32, %arg1: i32, %arg2: memref<8x1xi32, #tpu.memory_space<vmem>>, %arg3: memref<1x32x80xf32, #tpu.memory_space<vmem>>, %arg4: memref<1x80x512xf32, #tpu.memory_space<vmem>>, %arg5: memref<1x128x512xf32, #tpu.memory_space<vmem>>, %arg6: memref<1x1x512xf32, #tpu.memory_space<vmem>>, %arg7: memref<4x8x128xf32, #tpu.memory_space<vmem>>, %arg8: memref<8x128xf32, #tpu.memory_space<vmem>>, %arg9: memref<8x128xf32, #tpu.memory_space<vmem>>, %arg10: memref<32x512xf32, #tpu.memory_space<vmem>>) attributes {dimension_semantics = [#tpu.dimension_semantics<parallel>, #tpu.dimension_semantics<arbitrary>], iteration_bounds = array<i64: 2, 4>, scalar_prefetch = 0 : i64, scratch_operands = 3 : i64, tpu.core_type = #tpu.core_type<tc>, window_params = [{pipeline_mode = #tpu.pipeline_mode<synchronous>, transform_indices = @transform_0, window_bounds = array<i64: 8, 1>}, {transform_indices = @transform_1, window_bounds = array<i64: 1, 32, 80>}, {transform_indices = @transform_2, window_bounds = array<i64: 1, 80, 512>}, {transform_indices = @transform_3, window_bounds = array<i64: 1, 128, 512>}, {transform_indices = @transform_4, window_bounds = array<i64: 1, 1, 512>}, {transform_indices = @transform_5, window_bounds = array<i64: 4, 8, 128>}]} {
    %c0_i32 = arith.constant 0 : i32
    %0 = arith.cmpi eq, %arg1, %c0_i32 : i32
    %1 = arith.extui %0 : i1 to i32
    %c0_i32_0 = arith.constant 0 : i32
    %2 = arith.cmpi ne, %1, %c0_i32_0 : i32
    scf.if %2 {
      %cst_123 = arith.constant 0.000000e+00 : f32
      %268 = vector.broadcast %cst_123 : f32 to vector<8x128xf32>
      %c0_124 = arith.constant 0 : index
      %c0_125 = arith.constant 0 : index
      %269 = vector.load %arg8[%c0_124, %c0_125] : memref<8x128xf32, #tpu.memory_space<vmem>>, vector<8x128xf32>
      tpu.vector_store %arg8[%c0_124, %c0_125], %268 {strides = array<i32>} : memref<8x128xf32, #tpu.memory_space<vmem>>, vector<8x128xf32>,
      %cst_126 = arith.constant 0.000000e+00 : f32
      %270 = vector.broadcast %cst_126 : f32 to vector<8x128xf32>
      %c0_127 = arith.constant 0 : index
      %c0_128 = arith.constant 0 : index
      %271 = vector.load %arg9[%c0_127, %c0_128] : memref<8x128xf32, #tpu.memory_space<vmem>>, vector<8x128xf32>
      tpu.vector_store %arg9[%c0_127, %c0_128], %270 {strides = array<i32>} : memref<8x128xf32, #tpu.memory_space<vmem>>, vector<8x128xf32>,
    } else {
    }
    %c0 = arith.constant 0 : index
    %c0_1 = arith.constant 0 : index
    %c0_2 = arith.constant 0 : index
    %3 = vector.load %arg3[%c0, %c0_1, %c0_2] : memref<1x32x80xf32, #tpu.memory_space<vmem>>, vector<1x32x80xf32>
    %4 = vector.shape_cast %3 : vector<1x32x80xf32> to vector<32x80xf32>
    %c0_3 = arith.constant 0 : index
    %c0_4 = arith.constant 0 : index
    %c0_5 = arith.constant 0 : index
    %5 = vector.load %arg4[%c0_3, %c0_4, %c0_5] : memref<1x80x512xf32, #tpu.memory_space<vmem>>, vector<1x80x512xf32>
    %6 = vector.shape_cast %5 : vector<1x80x512xf32> to vector<80x512xf32>
    %cst = arith.constant dense<0.000000e+00> : vector<32x512xf32>
    %7 = tpu.matmul %4, %6, %cst {dimension_numbers = #tpu.dot_dimension_numbers<[1], [0], [0], [1], [0, 0, 1, 1], [], []>} : vector<32x80xf32>, vector<80x512xf32>, vector<32x512xf32> -> vector<32x512xf32>
    %c0_6 = arith.constant 0 : index
    %c0_7 = arith.constant 0 : index
    %8 = vector.load %arg10[%c0_6, %c0_7] : memref<32x512xf32, #tpu.memory_space<vmem>>, vector<32x512xf32>
    tpu.vector_store %arg10[%c0_6, %c0_7], %7 {strides = array<i32>} : memref<32x512xf32, #tpu.memory_space<vmem>>, vector<32x512xf32>,
    %c0_8 = arith.constant 0 : index
    %c0_9 = arith.constant 0 : index
    %9 = vector.load %arg2[%c0_8, %c0_9] : memref<8x1xi32, #tpu.memory_space<vmem>>, vector<8x1xi32>
    %c0_10 = arith.constant 0 : index
    %c0_11 = arith.constant 0 : index
    %c0_12 = arith.constant 0 : index
    %10 = vector.load %arg6[%c0_10, %c0_11, %c0_12] : memref<1x1x512xf32, #tpu.memory_space<vmem>>, vector<1x1x512xf32>
    %11 = vector.shape_cast %10 : vector<1x1x512xf32> to vector<1x512xf32>
    %c2_i32 = arith.constant 2 : i32
    %12 = arith.muli %c2_i32, %arg1 : i32
    %c3_i32 = arith.constant 3 : i32
    %13 = arith.subi %c3_i32, %12 : i32
    %14 = arith.muli %arg0, %13 : i32
    %15 = arith.addi %arg1, %14 : i32
    %c0_i32_13 = arith.constant 0 : i32
    %c2_i32_14 = arith.constant 2 : i32
    %16 = arith.muli %c2_i32_14, %c0_i32_13 : i32
    %c3_i32_15 = arith.constant 3 : i32
    %17 = arith.subi %c3_i32_15, %16 : i32
    %18 = arith.muli %arg0, %17 : i32
    %19 = arith.addi %c0_i32_13, %18 : i32
    %c4_i32 = arith.constant 4 : i32
    %20 = arith.muli %15, %c4_i32 : i32
    %21 = arith.addi %20, %19 : i32
    %c0_16 = arith.constant 0 : index
    %c0_17 = arith.constant 0 : index
    %22 = vector.load %arg8[%c0_16, %c0_17] : memref<8x128xf32, #tpu.memory_space<vmem>>, vector<8x128xf32>
    %c0_18 = arith.constant 0 : index
    %c0_19 = arith.constant 0 : index
    %c0_20 = arith.constant 0 : index
    %23 = vector.load %arg5[%c0_18, %c0_19, %c0_20] : memref<1x128x512xf32, #tpu.memory_space<vmem>>, vector<1x128x512xf32>
    %24 = vector.shape_cast %23 : vector<1x128x512xf32> to vector<128x512xf32>
    %cst_21 = arith.constant dense<0.000000e+00> : vector<8x512xf32>
    %25 = tpu.matmul %22, %24, %cst_21 {dimension_numbers = #tpu.dot_dimension_numbers<[1], [0], [0], [1], [0, 0, 1, 1], [], []>} : vector<8x128xf32>, vector<128x512xf32>, vector<8x512xf32> -> vector<8x512xf32>
    %c8_i32 = arith.constant 8 : i32
    %26 = arith.muli %19, %c8_i32 : i32
    %27 = tpu.assume_multiple %26, 8 : i32
    %28 = arith.index_cast %27 : i32 to index
    %c0_22 = arith.constant 0 : index
    %29 = vector.load %arg10[%28, %c0_22] : memref<32x512xf32, #tpu.memory_space<vmem>>, vector<8x512xf32>
    %30 = arith.addf %29, %25 : vector<8x512xf32>
    %31 = vector.broadcast %11 : vector<1x512xf32> to vector<8x512xf32>
    %32 = arith.addf %30, %31 : vector<8x512xf32>
    %33 = vector.extract_strided_slice %32 {offsets = [0, 0], sizes = [8, 128], strides = [1, 1]} : vector<8x512xf32> to vector<8x128xf32>
    %34 = arith.negf %33 : vector<8x128xf32>
    %35 = math.exp %34 : vector<8x128xf32>
    %cst_23 = arith.constant 1.000000e+00 : f32
    %36 = vector.broadcast %cst_23 : f32 to vector<8x128xf32>
    %37 = arith.addf %36, %35 : vector<8x128xf32>
    %38 = arith.divf %36, %37 : vector<8x128xf32>
    %39 = vector.extract_strided_slice %32 {offsets = [0, 128], sizes = [8, 128], strides = [1, 1]} : vector<8x512xf32> to vector<8x128xf32>
    %40 = arith.negf %39 : vector<8x128xf32>
    %41 = math.exp %40 : vector<8x128xf32>
    %cst_24 = arith.constant 1.000000e+00 : f32
    %42 = vector.broadcast %cst_24 : f32 to vector<8x128xf32>
    %43 = arith.addf %42, %41 : vector<8x128xf32>
    %44 = arith.divf %42, %43 : vector<8x128xf32>
    %45 = vector.extract_strided_slice %32 {offsets = [0, 256], sizes = [8, 128], strides = [1, 1]} : vector<8x512xf32> to vector<8x128xf32>
    %46 = math.tanh %45 : vector<8x128xf32>
    %47 = vector.extract_strided_slice %32 {offsets = [0, 384], sizes = [8, 128], strides = [1, 1]} : vector<8x512xf32> to vector<8x128xf32>
    %48 = arith.negf %47 : vector<8x128xf32>
    %49 = math.exp %48 : vector<8x128xf32>
    %cst_25 = arith.constant 1.000000e+00 : f32
    %50 = vector.broadcast %cst_25 : f32 to vector<8x128xf32>
    %51 = arith.addf %50, %49 : vector<8x128xf32>
    %52 = arith.divf %50, %51 : vector<8x128xf32>
    %c0_26 = arith.constant 0 : index
    %c0_27 = arith.constant 0 : index
    %53 = vector.load %arg9[%c0_26, %c0_27] : memref<8x128xf32, #tpu.memory_space<vmem>>, vector<8x128xf32>
    %54 = arith.mulf %44, %53 : vector<8x128xf32>
    %55 = arith.mulf %38, %46 : vector<8x128xf32>
    %56 = arith.addf %54, %55 : vector<8x128xf32>
    %57 = math.tanh %56 : vector<8x128xf32>
    %58 = arith.mulf %52, %57 : vector<8x128xf32>
    %59 = vector.broadcast %21 : i32 to vector<8x1xi32>
    %60 = arith.cmpi sgt, %9, %59 : vector<8x1xi32>
    %c0_28 = arith.constant 0 : index
    %c0_29 = arith.constant 0 : index
    %61 = vector.load %arg8[%c0_28, %c0_29] : memref<8x128xf32, #tpu.memory_space<vmem>>, vector<8x128xf32>
    %62 = vector.shape_cast %60 : vector<8x1xi1> to vector<8x1xi1>
    %63 = vector.broadcast %62 : vector<8x1xi1> to vector<8x128xi1>
    %64 = arith.select %63, %58, %61 : vector<8x128xi1>, vector<8x128xf32>
    %c0_30 = arith.constant 0 : index
    %c0_31 = arith.constant 0 : index
    %65 = vector.load %arg8[%c0_30, %c0_31] : memref<8x128xf32, #tpu.memory_space<vmem>>, vector<8x128xf32>
    tpu.vector_store %arg8[%c0_30, %c0_31], %64 {strides = array<i32>} : memref<8x128xf32, #tpu.memory_space<vmem>>, vector<8x128xf32>,
    %c0_32 = arith.constant 0 : index
    %c0_33 = arith.constant 0 : index
    %66 = vector.load %arg9[%c0_32, %c0_33] : memref<8x128xf32, #tpu.memory_space<vmem>>, vector<8x128xf32>
    %67 = vector.shape_cast %60 : vector<8x1xi1> to vector<8x1xi1>
    %68 = vector.broadcast %67 : vector<8x1xi1> to vector<8x128xi1>
    %69 = arith.select %68, %56, %66 : vector<8x128xi1>, vector<8x128xf32>
    %c0_34 = arith.constant 0 : index
    %c0_35 = arith.constant 0 : index
    %70 = vector.load %arg9[%c0_34, %c0_35] : memref<8x128xf32, #tpu.memory_space<vmem>>, vector<8x128xf32>
    tpu.vector_store %arg9[%c0_34, %c0_35], %69 {strides = array<i32>} : memref<8x128xf32, #tpu.memory_space<vmem>>, vector<8x128xf32>,
    %cst_36 = arith.constant 0.000000e+00 : f32
    %71 = vector.shape_cast %60 : vector<8x1xi1> to vector<8x1xi1>
    %72 = vector.broadcast %71 : vector<8x1xi1> to vector<8x128xi1>
    %73 = vector.broadcast %cst_36 : f32 to vector<8x128xf32>
    %74 = arith.select %72, %58, %73 : vector<8x128xi1>, vector<8x128xf32>
    %75 = arith.index_cast %19 : i32 to index
    %c0_37 = arith.constant 0 : index
    %c0_38 = arith.constant 0 : index
    %76 = vector.load %arg7[%75, %c0_37, %c0_38] : memref<4x8x128xf32, #tpu.memory_space<vmem>>, vector<1x8x128xf32>
    %77 = vector.shape_cast %76 : vector<1x8x128xf32> to vector<8x128xf32>
    %78 = vector.shape_cast %74 : vector<8x128xf32> to vector<1x8x128xf32>
    tpu.vector_store %arg7[%75, %c0_37, %c0_38], %78 {strides = array<i32>} : memref<4x8x128xf32, #tpu.memory_space<vmem>>, vector<1x8x128xf32>,
    %c1_i32 = arith.constant 1 : i32
    %c2_i32_39 = arith.constant 2 : i32
    %79 = arith.muli %c2_i32_39, %c1_i32 : i32
    %c3_i32_40 = arith.constant 3 : i32
    %80 = arith.subi %c3_i32_40, %79 : i32
    %81 = arith.muli %arg0, %80 : i32
    %82 = arith.addi %c1_i32, %81 : i32
    %c4_i32_41 = arith.constant 4 : i32
    %83 = arith.muli %15, %c4_i32_41 : i32
    %84 = arith.addi %83, %82 : i32
    %c0_42 = arith.constant 0 : index
    %c0_43 = arith.constant 0 : index
    %85 = vector.load %arg8[%c0_42, %c0_43] : memref<8x128xf32, #tpu.memory_space<vmem>>, vector<8x128xf32>
    %c0_44 = arith.constant 0 : index
    %c0_45 = arith.constant 0 : index
    %c0_46 = arith.constant 0 : index
    %86 = vector.load %arg5[%c0_44, %c0_45, %c0_46] : memref<1x128x512xf32, #tpu.memory_space<vmem>>, vector<1x128x512xf32>
    %87 = vector.shape_cast %86 : vector<1x128x512xf32> to vector<128x512xf32>
    %cst_47 = arith.constant dense<0.000000e+00> : vector<8x512xf32>
    %88 = tpu.matmul %85, %87, %cst_47 {dimension_numbers = #tpu.dot_dimension_numbers<[1], [0], [0], [1], [0, 0, 1, 1], [], []>} : vector<8x128xf32>, vector<128x512xf32>, vector<8x512xf32> -> vector<8x512xf32>
    %c8_i32_48 = arith.constant 8 : i32
    %89 = arith.muli %82, %c8_i32_48 : i32
    %90 = tpu.assume_multiple %89, 8 : i32
    %91 = arith.index_cast %90 : i32 to index
    %c0_49 = arith.constant 0 : index
    %92 = vector.load %arg10[%91, %c0_49] : memref<32x512xf32, #tpu.memory_space<vmem>>, vector<8x512xf32>
    %93 = arith.addf %92, %88 : vector<8x512xf32>
    %94 = vector.broadcast %11 : vector<1x512xf32> to vector<8x512xf32>
    %95 = arith.addf %93, %94 : vector<8x512xf32>
    %96 = vector.extract_strided_slice %95 {offsets = [0, 0], sizes = [8, 128], strides = [1, 1]} : vector<8x512xf32> to vector<8x128xf32>
    %97 = arith.negf %96 : vector<8x128xf32>
    %98 = math.exp %97 : vector<8x128xf32>
    %cst_50 = arith.constant 1.000000e+00 : f32
    %99 = vector.broadcast %cst_50 : f32 to vector<8x128xf32>
    %100 = arith.addf %99, %98 : vector<8x128xf32>
    %101 = arith.divf %99, %100 : vector<8x128xf32>
    %102 = vector.extract_strided_slice %95 {offsets = [0, 128], sizes = [8, 128], strides = [1, 1]} : vector<8x512xf32> to vector<8x128xf32>
    %103 = arith.negf %102 : vector<8x128xf32>
    %104 = math.exp %103 : vector<8x128xf32>
    %cst_51 = arith.constant 1.000000e+00 : f32
    %105 = vector.broadcast %cst_51 : f32 to vector<8x128xf32>
    %106 = arith.addf %105, %104 : vector<8x128xf32>
    %107 = arith.divf %105, %106 : vector<8x128xf32>
    %108 = vector.extract_strided_slice %95 {offsets = [0, 256], sizes = [8, 128], strides = [1, 1]} : vector<8x512xf32> to vector<8x128xf32>
    %109 = math.tanh %108 : vector<8x128xf32>
    %110 = vector.extract_strided_slice %95 {offsets = [0, 384], sizes = [8, 128], strides = [1, 1]} : vector<8x512xf32> to vector<8x128xf32>
    %111 = arith.negf %110 : vector<8x128xf32>
    %112 = math.exp %111 : vector<8x128xf32>
    %cst_52 = arith.constant 1.000000e+00 : f32
    %113 = vector.broadcast %cst_52 : f32 to vector<8x128xf32>
    %114 = arith.addf %113, %112 : vector<8x128xf32>
    %115 = arith.divf %113, %114 : vector<8x128xf32>
    %c0_53 = arith.constant 0 : index
    %c0_54 = arith.constant 0 : index
    %116 = vector.load %arg9[%c0_53, %c0_54] : memref<8x128xf32, #tpu.memory_space<vmem>>, vector<8x128xf32>
    %117 = arith.mulf %107, %116 : vector<8x128xf32>
    %118 = arith.mulf %101, %109 : vector<8x128xf32>
    %119 = arith.addf %117, %118 : vector<8x128xf32>
    %120 = math.tanh %119 : vector<8x128xf32>
    %121 = arith.mulf %115, %120 : vector<8x128xf32>
    %122 = vector.broadcast %84 : i32 to vector<8x1xi32>
    %123 = arith.cmpi sgt, %9, %122 : vector<8x1xi32>
    %c0_55 = arith.constant 0 : index
    %c0_56 = arith.constant 0 : index
    %124 = vector.load %arg8[%c0_55, %c0_56] : memref<8x128xf32, #tpu.memory_space<vmem>>, vector<8x128xf32>
    %125 = vector.shape_cast %123 : vector<8x1xi1> to vector<8x1xi1>
    %126 = vector.broadcast %125 : vector<8x1xi1> to vector<8x128xi1>
    %127 = arith.select %126, %121, %124 : vector<8x128xi1>, vector<8x128xf32>
    %c0_57 = arith.constant 0 : index
    %c0_58 = arith.constant 0 : index
    %128 = vector.load %arg8[%c0_57, %c0_58] : memref<8x128xf32, #tpu.memory_space<vmem>>, vector<8x128xf32>
    tpu.vector_store %arg8[%c0_57, %c0_58], %127 {strides = array<i32>} : memref<8x128xf32, #tpu.memory_space<vmem>>, vector<8x128xf32>,
    %c0_59 = arith.constant 0 : index
    %c0_60 = arith.constant 0 : index
    %129 = vector.load %arg9[%c0_59, %c0_60] : memref<8x128xf32, #tpu.memory_space<vmem>>, vector<8x128xf32>
    %130 = vector.shape_cast %123 : vector<8x1xi1> to vector<8x1xi1>
    %131 = vector.broadcast %130 : vector<8x1xi1> to vector<8x128xi1>
    %132 = arith.select %131, %119, %129 : vector<8x128xi1>, vector<8x128xf32>
    %c0_61 = arith.constant 0 : index
    %c0_62 = arith.constant 0 : index
    %133 = vector.load %arg9[%c0_61, %c0_62] : memref<8x128xf32, #tpu.memory_space<vmem>>, vector<8x128xf32>
    tpu.vector_store %arg9[%c0_61, %c0_62], %132 {strides = array<i32>} : memref<8x128xf32, #tpu.memory_space<vmem>>, vector<8x128xf32>,
    %cst_63 = arith.constant 0.000000e+00 : f32
    %134 = vector.shape_cast %123 : vector<8x1xi1> to vector<8x1xi1>
    %135 = vector.broadcast %134 : vector<8x1xi1> to vector<8x128xi1>
    %136 = vector.broadcast %cst_63 : f32 to vector<8x128xf32>
    %137 = arith.select %135, %121, %136 : vector<8x128xi1>, vector<8x128xf32>
    %138 = arith.index_cast %82 : i32 to index
    %c0_64 = arith.constant 0 : index
    %c0_65 = arith.constant 0 : index
    %139 = vector.load %arg7[%138, %c0_64, %c0_65] : memref<4x8x128xf32, #tpu.memory_space<vmem>>, vector<1x8x128xf32>
    %140 = vector.shape_cast %139 : vector<1x8x128xf32> to vector<8x128xf32>
    %141 = vector.shape_cast %137 : vector<8x128xf32> to vector<1x8x128xf32>
    tpu.vector_store %arg7[%138, %c0_64, %c0_65], %141 {strides = array<i32>} : memref<4x8x128xf32, #tpu.memory_space<vmem>>, vector<1x8x128xf32>,
    %c2_i32_66 = arith.constant 2 : i32
    %c2_i32_67 = arith.constant 2 : i32
    %142 = arith.muli %c2_i32_67, %c2_i32_66 : i32
    %c3_i32_68 = arith.constant 3 : i32
    %143 = arith.subi %c3_i32_68, %142 : i32
    %144 = arith.muli %arg0, %143 : i32
    %145 = arith.addi %c2_i32_66, %144 : i32
    %c4_i32_69 = arith.constant 4 : i32
    %146 = arith.muli %15, %c4_i32_69 : i32
    %147 = arith.addi %146, %145 : i32
    %c0_70 = arith.constant 0 : index
    %c0_71 = arith.constant 0 : index
    %148 = vector.load %arg8[%c0_70, %c0_71] : memref<8x128xf32, #tpu.memory_space<vmem>>, vector<8x128xf32>
    %c0_72 = arith.constant 0 : index
    %c0_73 = arith.constant 0 : index
    %c0_74 = arith.constant 0 : index
    %149 = vector.load %arg5[%c0_72, %c0_73, %c0_74] : memref<1x128x512xf32, #tpu.memory_space<vmem>>, vector<1x128x512xf32>
    %150 = vector.shape_cast %149 : vector<1x128x512xf32> to vector<128x512xf32>
    %cst_75 = arith.constant dense<0.000000e+00> : vector<8x512xf32>
    %151 = tpu.matmul %148, %150, %cst_75 {dimension_numbers = #tpu.dot_dimension_numbers<[1], [0], [0], [1], [0, 0, 1, 1], [], []>} : vector<8x128xf32>, vector<128x512xf32>, vector<8x512xf32> -> vector<8x512xf32>
    %c8_i32_76 = arith.constant 8 : i32
    %152 = arith.muli %145, %c8_i32_76 : i32
    %153 = tpu.assume_multiple %152, 8 : i32
    %154 = arith.index_cast %153 : i32 to index
    %c0_77 = arith.constant 0 : index
    %155 = vector.load %arg10[%154, %c0_77] : memref<32x512xf32, #tpu.memory_space<vmem>>, vector<8x512xf32>
    %156 = arith.addf %155, %151 : vector<8x512xf32>
    %157 = vector.broadcast %11 : vector<1x512xf32> to vector<8x512xf32>
    %158 = arith.addf %156, %157 : vector<8x512xf32>
    %159 = vector.extract_strided_slice %158 {offsets = [0, 0], sizes = [8, 128], strides = [1, 1]} : vector<8x512xf32> to vector<8x128xf32>
    %160 = arith.negf %159 : vector<8x128xf32>
    %161 = math.exp %160 : vector<8x128xf32>
    %cst_78 = arith.constant 1.000000e+00 : f32
    %162 = vector.broadcast %cst_78 : f32 to vector<8x128xf32>
    %163 = arith.addf %162, %161 : vector<8x128xf32>
    %164 = arith.divf %162, %163 : vector<8x128xf32>
    %165 = vector.extract_strided_slice %158 {offsets = [0, 128], sizes = [8, 128], strides = [1, 1]} : vector<8x512xf32> to vector<8x128xf32>
    %166 = arith.negf %165 : vector<8x128xf32>
    %167 = math.exp %166 : vector<8x128xf32>
    %cst_79 = arith.constant 1.000000e+00 : f32
    %168 = vector.broadcast %cst_79 : f32 to vector<8x128xf32>
    %169 = arith.addf %168, %167 : vector<8x128xf32>
    %170 = arith.divf %168, %169 : vector<8x128xf32>
    %171 = vector.extract_strided_slice %158 {offsets = [0, 256], sizes = [8, 128], strides = [1, 1]} : vector<8x512xf32> to vector<8x128xf32>
    %172 = math.tanh %171 : vector<8x128xf32>
    %173 = vector.extract_strided_slice %158 {offsets = [0, 384], sizes = [8, 128], strides = [1, 1]} : vector<8x512xf32> to vector<8x128xf32>
    %174 = arith.negf %173 : vector<8x128xf32>
    %175 = math.exp %174 : vector<8x128xf32>
    %cst_80 = arith.constant 1.000000e+00 : f32
    %176 = vector.broadcast %cst_80 : f32 to vector<8x128xf32>
    %177 = arith.addf %176, %175 : vector<8x128xf32>
    %178 = arith.divf %176, %177 : vector<8x128xf32>
    %c0_81 = arith.constant 0 : index
    %c0_82 = arith.constant 0 : index
    %179 = vector.load %arg9[%c0_81, %c0_82] : memref<8x128xf32, #tpu.memory_space<vmem>>, vector<8x128xf32>
    %180 = arith.mulf %170, %179 : vector<8x128xf32>
    %181 = arith.mulf %164, %172 : vector<8x128xf32>
    %182 = arith.addf %180, %181 : vector<8x128xf32>
    %183 = math.tanh %182 : vector<8x128xf32>
    %184 = arith.mulf %178, %183 : vector<8x128xf32>
    %185 = vector.broadcast %147 : i32 to vector<8x1xi32>
    %186 = arith.cmpi sgt, %9, %185 : vector<8x1xi32>
    %c0_83 = arith.constant 0 : index
    %c0_84 = arith.constant 0 : index
    %187 = vector.load %arg8[%c0_83, %c0_84] : memref<8x128xf32, #tpu.memory_space<vmem>>, vector<8x128xf32>
    %188 = vector.shape_cast %186 : vector<8x1xi1> to vector<8x1xi1>
    %189 = vector.broadcast %188 : vector<8x1xi1> to vector<8x128xi1>
    %190 = arith.select %189, %184, %187 : vector<8x128xi1>, vector<8x128xf32>
    %c0_85 = arith.constant 0 : index
    %c0_86 = arith.constant 0 : index
    %191 = vector.load %arg8[%c0_85, %c0_86] : memref<8x128xf32, #tpu.memory_space<vmem>>, vector<8x128xf32>
    tpu.vector_store %arg8[%c0_85, %c0_86], %190 {strides = array<i32>} : memref<8x128xf32, #tpu.memory_space<vmem>>, vector<8x128xf32>,
    %c0_87 = arith.constant 0 : index
    %c0_88 = arith.constant 0 : index
    %192 = vector.load %arg9[%c0_87, %c0_88] : memref<8x128xf32, #tpu.memory_space<vmem>>, vector<8x128xf32>
    %193 = vector.shape_cast %186 : vector<8x1xi1> to vector<8x1xi1>
    %194 = vector.broadcast %193 : vector<8x1xi1> to vector<8x128xi1>
    %195 = arith.select %194, %182, %192 : vector<8x128xi1>, vector<8x128xf32>
    %c0_89 = arith.constant 0 : index
    %c0_90 = arith.constant 0 : index
    %196 = vector.load %arg9[%c0_89, %c0_90] : memref<8x128xf32, #tpu.memory_space<vmem>>, vector<8x128xf32>
    tpu.vector_store %arg9[%c0_89, %c0_90], %195 {strides = array<i32>} : memref<8x128xf32, #tpu.memory_space<vmem>>, vector<8x128xf32>,
    %cst_91 = arith.constant 0.000000e+00 : f32
    %197 = vector.shape_cast %186 : vector<8x1xi1> to vector<8x1xi1>
    %198 = vector.broadcast %197 : vector<8x1xi1> to vector<8x128xi1>
    %199 = vector.broadcast %cst_91 : f32 to vector<8x128xf32>
    %200 = arith.select %198, %184, %199 : vector<8x128xi1>, vector<8x128xf32>
    %201 = arith.index_cast %145 : i32 to index
    %c0_92 = arith.constant 0 : index
    %c0_93 = arith.constant 0 : index
    %202 = vector.load %arg7[%201, %c0_92, %c0_93] : memref<4x8x128xf32, #tpu.memory_space<vmem>>, vector<1x8x128xf32>
    %203 = vector.shape_cast %202 : vector<1x8x128xf32> to vector<8x128xf32>
    %204 = vector.shape_cast %200 : vector<8x128xf32> to vector<1x8x128xf32>
    tpu.vector_store %arg7[%201, %c0_92, %c0_93], %204 {strides = array<i32>} : memref<4x8x128xf32, #tpu.memory_space<vmem>>, vector<1x8x128xf32>,
    %c3_i32_94 = arith.constant 3 : i32
    %c2_i32_95 = arith.constant 2 : i32
    %205 = arith.muli %c2_i32_95, %c3_i32_94 : i32
    %c3_i32_96 = arith.constant 3 : i32
    %206 = arith.subi %c3_i32_96, %205 : i32
    %207 = arith.muli %arg0, %206 : i32
    %208 = arith.addi %c3_i32_94, %207 : i32
    %c4_i32_97 = arith.constant 4 : i32
    %209 = arith.muli %15, %c4_i32_97 : i32
    %210 = arith.addi %209, %208 : i32
    %c0_98 = arith.constant 0 : index
    %c0_99 = arith.constant 0 : index
    %211 = vector.load %arg8[%c0_98, %c0_99] : memref<8x128xf32, #tpu.memory_space<vmem>>, vector<8x128xf32>
    %c0_100 = arith.constant 0 : index
    %c0_101 = arith.constant 0 : index
    %c0_102 = arith.constant 0 : index
    %212 = vector.load %arg5[%c0_100, %c0_101, %c0_102] : memref<1x128x512xf32, #tpu.memory_space<vmem>>, vector<1x128x512xf32>
    %213 = vector.shape_cast %212 : vector<1x128x512xf32> to vector<128x512xf32>
    %cst_103 = arith.constant dense<0.000000e+00> : vector<8x512xf32>
    %214 = tpu.matmul %211, %213, %cst_103 {dimension_numbers = #tpu.dot_dimension_numbers<[1], [0], [0], [1], [0, 0, 1, 1], [], []>} : vector<8x128xf32>, vector<128x512xf32>, vector<8x512xf32> -> vector<8x512xf32>
    %c8_i32_104 = arith.constant 8 : i32
    %215 = arith.muli %208, %c8_i32_104 : i32
    %216 = tpu.assume_multiple %215, 8 : i32
    %217 = arith.index_cast %216 : i32 to index
    %c0_105 = arith.constant 0 : index
    %218 = vector.load %arg10[%217, %c0_105] : memref<32x512xf32, #tpu.memory_space<vmem>>, vector<8x512xf32>
    %219 = arith.addf %218, %214 : vector<8x512xf32>
    %220 = vector.broadcast %11 : vector<1x512xf32> to vector<8x512xf32>
    %221 = arith.addf %219, %220 : vector<8x512xf32>
    %222 = vector.extract_strided_slice %221 {offsets = [0, 0], sizes = [8, 128], strides = [1, 1]} : vector<8x512xf32> to vector<8x128xf32>
    %223 = arith.negf %222 : vector<8x128xf32>
    %224 = math.exp %223 : vector<8x128xf32>
    %cst_106 = arith.constant 1.000000e+00 : f32
    %225 = vector.broadcast %cst_106 : f32 to vector<8x128xf32>
    %226 = arith.addf %225, %224 : vector<8x128xf32>
    %227 = arith.divf %225, %226 : vector<8x128xf32>
    %228 = vector.extract_strided_slice %221 {offsets = [0, 128], sizes = [8, 128], strides = [1, 1]} : vector<8x512xf32> to vector<8x128xf32>
    %229 = arith.negf %228 : vector<8x128xf32>
    %230 = math.exp %229 : vector<8x128xf32>
    %cst_107 = arith.constant 1.000000e+00 : f32
    %231 = vector.broadcast %cst_107 : f32 to vector<8x128xf32>
    %232 = arith.addf %231, %230 : vector<8x128xf32>
    %233 = arith.divf %231, %232 : vector<8x128xf32>
    %234 = vector.extract_strided_slice %221 {offsets = [0, 256], sizes = [8, 128], strides = [1, 1]} : vector<8x512xf32> to vector<8x128xf32>
    %235 = math.tanh %234 : vector<8x128xf32>
    %236 = vector.extract_strided_slice %221 {offsets = [0, 384], sizes = [8, 128], strides = [1, 1]} : vector<8x512xf32> to vector<8x128xf32>
    %237 = arith.negf %236 : vector<8x128xf32>
    %238 = math.exp %237 : vector<8x128xf32>
    %cst_108 = arith.constant 1.000000e+00 : f32
    %239 = vector.broadcast %cst_108 : f32 to vector<8x128xf32>
    %240 = arith.addf %239, %238 : vector<8x128xf32>
    %241 = arith.divf %239, %240 : vector<8x128xf32>
    %c0_109 = arith.constant 0 : index
    %c0_110 = arith.constant 0 : index
    %242 = vector.load %arg9[%c0_109, %c0_110] : memref<8x128xf32, #tpu.memory_space<vmem>>, vector<8x128xf32>
    %243 = arith.mulf %233, %242 : vector<8x128xf32>
    %244 = arith.mulf %227, %235 : vector<8x128xf32>
    %245 = arith.addf %243, %244 : vector<8x128xf32>
    %246 = math.tanh %245 : vector<8x128xf32>
    %247 = arith.mulf %241, %246 : vector<8x128xf32>
    %248 = vector.broadcast %210 : i32 to vector<8x1xi32>
    %249 = arith.cmpi sgt, %9, %248 : vector<8x1xi32>
    %c0_111 = arith.constant 0 : index
    %c0_112 = arith.constant 0 : index
    %250 = vector.load %arg8[%c0_111, %c0_112] : memref<8x128xf32, #tpu.memory_space<vmem>>, vector<8x128xf32>
    %251 = vector.shape_cast %249 : vector<8x1xi1> to vector<8x1xi1>
    %252 = vector.broadcast %251 : vector<8x1xi1> to vector<8x128xi1>
    %253 = arith.select %252, %247, %250 : vector<8x128xi1>, vector<8x128xf32>
    %c0_113 = arith.constant 0 : index
    %c0_114 = arith.constant 0 : index
    %254 = vector.load %arg8[%c0_113, %c0_114] : memref<8x128xf32, #tpu.memory_space<vmem>>, vector<8x128xf32>
    tpu.vector_store %arg8[%c0_113, %c0_114], %253 {strides = array<i32>} : memref<8x128xf32, #tpu.memory_space<vmem>>, vector<8x128xf32>,
    %c0_115 = arith.constant 0 : index
    %c0_116 = arith.constant 0 : index
    %255 = vector.load %arg9[%c0_115, %c0_116] : memref<8x128xf32, #tpu.memory_space<vmem>>, vector<8x128xf32>
    %256 = vector.shape_cast %249 : vector<8x1xi1> to vector<8x1xi1>
    %257 = vector.broadcast %256 : vector<8x1xi1> to vector<8x128xi1>
    %258 = arith.select %257, %245, %255 : vector<8x128xi1>, vector<8x128xf32>
    %c0_117 = arith.constant 0 : index
    %c0_118 = arith.constant 0 : index
    %259 = vector.load %arg9[%c0_117, %c0_118] : memref<8x128xf32, #tpu.memory_space<vmem>>, vector<8x128xf32>
    tpu.vector_store %arg9[%c0_117, %c0_118], %258 {strides = array<i32>} : memref<8x128xf32, #tpu.memory_space<vmem>>, vector<8x128xf32>,
    %cst_119 = arith.constant 0.000000e+00 : f32
    %260 = vector.shape_cast %249 : vector<8x1xi1> to vector<8x1xi1>
    %261 = vector.broadcast %260 : vector<8x1xi1> to vector<8x128xi1>
    %262 = vector.broadcast %cst_119 : f32 to vector<8x128xf32>
    %263 = arith.select %261, %247, %262 : vector<8x128xi1>, vector<8x128xf32>
    %264 = arith.index_cast %208 : i32 to index
    %c0_120 = arith.constant 0 : index
    %c0_121 = arith.constant 0 : index
    %265 = vector.load %arg7[%264, %c0_120, %c0_121] : memref<4x8x128xf32, #tpu.memory_space<vmem>>, vector<1x8x128xf32>
    %266 = vector.shape_cast %265 : vector<1x8x128xf32> to vector<8x128xf32>
    %267 = vector.shape_cast %263 : vector<8x128xf32> to vector<1x8x128xf32>
    tpu.vector_store %arg7[%264, %c0_120, %c0_121], %267 {strides = array<i32>} : memref<4x8x128xf32, #tpu.memory_space<vmem>>, vector<1x8x128xf32>,
    %c4_i32_122 = arith.constant 4 : i32
    return
  }
  func.func @transform_0(%arg0: i32, %arg1: i32) -> (i32, i32) {
    %c0_i32 = arith.constant 0 : i32
    %c0_i32_0 = arith.constant 0 : i32
    %c0_i32_1 = arith.constant 0 : i32
    return %c0_i32, %c0_i32_0 : i32, i32
  }
  func.func @transform_1(%arg0: i32, %arg1: i32) -> (i32, i32, i32) {
    %c2_i32 = arith.constant 2 : i32
    %0 = arith.muli %c2_i32, %arg1 : i32
    %c3_i32 = arith.constant 3 : i32
    %1 = arith.subi %c3_i32, %0 : i32
    %2 = arith.muli %arg0, %1 : i32
    %3 = arith.addi %arg1, %2 : i32
    %c0_i32 = arith.constant 0 : i32
    %c0_i32_0 = arith.constant 0 : i32
    %c0_i32_1 = arith.constant 0 : i32
    return %3, %c0_i32, %c0_i32_0 : i32, i32, i32
  }
  func.func @transform_2(%arg0: i32, %arg1: i32) -> (i32, i32, i32) {
    %c0_i32 = arith.constant 0 : i32
    %c0_i32_0 = arith.constant 0 : i32
    %c0_i32_1 = arith.constant 0 : i32
    return %arg0, %c0_i32, %c0_i32_0 : i32, i32, i32
  }
  func.func @transform_3(%arg0: i32, %arg1: i32) -> (i32, i32, i32) {
    %c0_i32 = arith.constant 0 : i32
    %c0_i32_0 = arith.constant 0 : i32
    %c0_i32_1 = arith.constant 0 : i32
    return %arg0, %c0_i32, %c0_i32_0 : i32, i32, i32
  }
  func.func @transform_4(%arg0: i32, %arg1: i32) -> (i32, i32, i32) {
    %c0_i32 = arith.constant 0 : i32
    %c0_i32_0 = arith.constant 0 : i32
    %c0_i32_1 = arith.constant 0 : i32
    return %arg0, %c0_i32, %c0_i32_0 : i32, i32, i32
  }
  func.func @transform_5(%arg0: i32, %arg1: i32) -> (i32, i32, i32) {
    %c2_i32 = arith.constant 2 : i32
    %0 = arith.muli %c2_i32, %arg1 : i32
    %c3_i32 = arith.constant 3 : i32
    %1 = arith.subi %c3_i32, %0 : i32
    %2 = arith.muli %arg0, %1 : i32
    %3 = arith.addi %arg1, %2 : i32
    %c0_i32 = arith.constant 0 : i32
    %c0_i32_0 = arith.constant 0 : i32
    return %3, %c0_i32, %arg0 : i32, i32, i32
  }
}

</mosaic_0001>

<llo_original>
// kernel: tpu_custom_call.1
$region0: #{tpu_custom_call.1}
  #allocation0 [shape = 'u32[]', space=smem, size = 0x4, offset = 0x4, fixed_abs, tag = 'smem constant byte address 0x4 - core index']
  #allocation1 [shape = 'u32[72,128]{1,0:T(1,128)}', space=vmem, size = 0x9000, scoped, tag = 'internal scratch']
  #allocation2 [shape = 'f32[8,128]{1,0:T(8,128)}', space=vmem, size = 0x1000, scoped, tag = 'scratch operand']
  #allocation3 [shape = 'f32[8,128]{1,0:T(8,128)}', space=vmem, size = 0x1000, scoped, tag = 'scratch operand']
  #allocation4 [shape = 'f32[32,512]{1,0:T(8,128)}', space=vmem, size = 0x10000, scoped, tag = 'scratch operand']
  %s0 = inlined_call_operand.vmem [shape: s32[8,1], index: 0, kind: input, shape index: {}]
  %s1 = inlined_call_operand.hbm [shape: f32[4,32,80], index: 1, kind: input, shape index: {}]
  %s2 = inlined_call_operand.hbm [shape: f32[2,80,512], index: 2, kind: input, shape index: {}]
  %s3 = inlined_call_operand.hbm [shape: f32[2,128,512], index: 3, kind: input, shape index: {}]
  %s4 = inlined_call_operand.vmem [shape: f32[2,1,512], index: 4, kind: input, shape index: {}]
  %s5 = inlined_call_operand.hbm [shape: f32[16,8,256], index: 5, kind: output, shape index: {}]
  %s6 = sld [smem:[#allocation0]]
  $region69: #{tpu_custom_call.1} parent=0
    _
  %s8 = ssub.s32 1, %s6
  %s9 = scalar_select 0, %s8, %s6
  $region1: #{tpu_custom_call.1} parent=0
    #allocation5 [shape = 'u8[32768]{0}', space=vmem, size = 0x8000, scoped, tag = 'input window, operand 1']
    #allocation6 [shape = 's32[2]{0}', space=sflag, size = 0x8, scoped, tag = 'scoped memory for tpu_custom_call.1']
    #allocation7 [shape = 's32[2]{0}', space=sflag, size = 0x8, scoped, tag = 'scoped memory for tpu_custom_call.1']
    #allocation8 [shape = 'u8[327680]{0}', space=vmem, size = 0x50000, scoped, tag = 'input window, operand 2']
    #allocation9 [shape = 's32[2]{0}', space=sflag, size = 0x8, scoped, tag = 'scoped memory for tpu_custom_call.1']
    #allocation10 [shape = 'u8[524288]{0}', space=vmem, size = 0x80000, scoped, tag = 'input window, operand 3']
    #allocation11 [shape = 'u8[32768]{0}', space=vmem, size = 0x8000, scoped, tag = 'output window, operand 0']
    %10 = vsyncpa [#allocation6], 0
    %s11 = scalar_lea.sflag [#allocation6], 1
    %12 = vsyncpa %s11, 0
    %13 = vsyncpa [#allocation9], 0
    %s14 = scalar_lea.sflag [#allocation9], 1
    %15 = vsyncpa %s14, 0
    %16 = vsyncpa [#allocation7], 0
    %s17 = scalar_lea.sflag [#allocation7], 1
    %18 = vsyncpa %s17, 0
    loop: start=0, step=1, limit=10
    $region2: #{tpu_custom_call.1} parent=1 // loop_pre_header
      _
    $region3: #{tpu_custom_call.1} parent=1 // loop_header
      %s20 = sphi 0, %s24
      %p21 = scmp.ge.s32.totalorder %s20, 10
      %s27 = sphi 0, %s39
      %s28 = sphi 0, %s35
      %s29 = sphi 0, %s27
      %s30 = sphi 0, %s28
      %s31 = sphi 0, %s29
      %s32 = sphi 0, %s30
      %s40 = sphi 0, %s40
      %s42 = sphi 0, %s40
      %s43 = sphi 0, %s42
      %s57 = sphi 0, %s43
      %s71 = sphi 0, %s73
      %s74 = sphi 0, %s71
      %s75 = sphi 0, %s74
      %s91 = sphi 0, %s75
      %s97 = sphi 0, %s99
      %s100 = sphi 0, %s97
      %s101 = sphi 0, %s100
      %s117 = sphi 0, %s101
      %s123 = sphi 0, %s125
      %s126 = sphi 0, %s123
      %s127 = sphi 0, %s126
      %s143 = sphi 0, %s127
      %s149 = sphi 0, %s151
      %s152 = sphi 0, %s149
      %s153 = sphi 0, %s152
      %s169 = sphi 0, %s153
      %s185 = sphi 0, %s187
      %s188 = sphi 0, %s185
      %s189 = sphi 0, %s188
      %s205 = sphi 0, %s189
    $region4: #{tpu_custom_call.1} parent=1 // loop_header_branch
      %23 = sbr.rel (%p21) target = $region8
    $region5: #{tpu_custom_call.1} parent=1 // loop_body
      %s25 = ssub.s32 %s20, 1
      %s26 = ssub.s32 %s20, 2
      %s33 = sadd.s32 1, %s28
      %p34 = scmp.ge.s32.totalorder %s33, 4
      %s35 = scalar_select %p34, 0, %s33
      %s36 = sadd.s32 1, %s27
      %s37 = scalar_select %p34, %s36, %s27
      %p38 = scmp.ge.s32.totalorder %s37, 2
      %s39 = scalar_select %p38, 0, %s37
      %s41 = sadd.s32 %s40, 1
      %p44 = scmp.eq.s32.totalorder %s20, 7
      %p45 = scmp.ne.s32.totalorder %s40, %s42
      %p46 = scmp.eq.s32.totalorder %s20, 0
      %p47 = por %p45, %p46
      %p48 = scmp.ne.s32.totalorder %s40, %s42
      %p49 = scmp.eq.s32.totalorder %s25, 7
      %p50 = por %p48, %p49
      %p51 = scmp.ne.s32.totalorder %s42, %s43
      %p52 = scmp.eq.s32.totalorder %s25, 0
      %p53 = por %p51, %p52
      %p54 = scmp.ne.s32.totalorder %s42, %s43
      %p55 = scmp.eq.s32.totalorder %s26, 7
      %p56 = por %p54, %p55
      %p58 = scmp.ne.s32.totalorder %s43, %s57
      %p59 = scmp.eq.s32.totalorder %s26, 0
      %p60 = por %p58, %p59
      %s61 = smul.u32 %s28, 2
      %s62 = ssub.s32 3, %s61
      %s63 = smul.u32 %s27, %s62
      %s64 = sadd.s32 %s28, %s63
      %s65 = smul.u32 %s35, 2
      %s66 = ssub.s32 3, %s65
      %s67 = smul.u32 %s39, %s66
      %s68 = sadd.s32 %s35, %s67
      %s69 = ssub.s32 %s64, %s68
      %p70 = scmp.eq.s32.totalorder %s69, 0
      %s72 = sadd.s32 %s71, 1
      %s73 = scalar_select %p70, %s71, %s72
      %p76 = pneg %p70
      %p77 = scmp.eq.s32.totalorder %s20, 7
      %p78 = por %p76, %p77
      %p79 = scmp.ne.s32.totalorder %s71, %s74
      %p80 = scmp.eq.s32.totalorder %s20, 0
      %p81 = por %p79, %p80
      %p82 = scmp.ne.s32.totalorder %s71, %s74
      %p83 = scmp.eq.s32.totalorder %s25, 7
      %p84 = por %p82, %p83
      %p85 = scmp.ne.s32.totalorder %s74, %s75
      %p86 = scmp.eq.s32.totalorder %s25, 0
      %p87 = por %p85, %p86
      %p88 = scmp.ne.s32.totalorder %s74, %s75
      %p89 = scmp.eq.s32.totalorder %s26, 7
      %p90 = por %p88, %p89
      %p92 = scmp.ne.s32.totalorder %s75, %s91
      %p93 = scmp.eq.s32.totalorder %s26, 0
      %p94 = por %p92, %p93
      %s95 = ssub.s32 %s27, %s39
      %p96 = scmp.eq.s32.totalorder %s95, 0
      %s98 = sadd.s32 %s97, 1
      %s99 = scalar_select %p96, %s97, %s98
      %p102 = pneg %p96
      %p103 = scmp.eq.s32.totalorder %s20, 7
      %p104 = por %p102, %p103
      %p105 = scmp.ne.s32.totalorder %s97, %s100
      %p106 = scmp.eq.s32.totalorder %s20, 0
      %p107 = por %p105, %p106
      %p108 = scmp.ne.s32.totalorder %s97, %s100
      %p109 = scmp.eq.s32.totalorder %s25, 7
      %p110 = por %p108, %p109
      %p111 = scmp.ne.s32.totalorder %s100, %s101
      %p112 = scmp.eq.s32.totalorder %s25, 0
      %p113 = por %p111, %p112
      %p114 = scmp.ne.s32.totalorder %s100, %s101
      %p115 = scmp.eq.s32.totalorder %s26, 7
      %p116 = por %p114, %p115
      %p118 = scmp.ne.s32.totalorder %s101, %s117
      %p119 = scmp.eq.s32.totalorder %s26, 0
      %p120 = por %p118, %p119
      %s121 = ssub.s32 %s27, %s39
      %p122 = scmp.eq.s32.totalorder %s121, 0
      %s124 = sadd.s32 %s123, 1
      %s125 = scalar_select %p122, %s123, %s124
      %p128 = pneg %p122
      %p129 = scmp.eq.s32.totalorder %s20, 7
      %p130 = por %p128, %p129
      %p131 = scmp.ne.s32.totalorder %s123, %s126
      %p132 = scmp.eq.s32.totalorder %s20, 0
      %p133 = por %p131, %p132
      %p134 = scmp.ne.s32.totalorder %s123, %s126
      %p135 = scmp.eq.s32.totalorder %s25, 7
      %p136 = por %p134, %p135
      %p137 = scmp.ne.s32.totalorder %s126, %s127
      %p138 = scmp.eq.s32.totalorder %s25, 0
      %p139 = por %p137, %p138
      %p140 = scmp.ne.s32.totalorder %s126, %s127
      %p141 = scmp.eq.s32.totalorder %s26, 7
      %p142 = por %p140, %p141
      %p144 = scmp.ne.s32.totalorder %s127, %s143
      %p145 = scmp.eq.s32.totalorder %s26, 0
      %p146 = por %p144, %p145
      %s147 = ssub.s32 %s27, %s39
      %p148 = scmp.eq.s32.totalorder %s147, 0
      %s150 = sadd.s32 %s149, 1
      %s151 = scalar_select %p148, %s149, %s150
      %p154 = pneg %p148
      %p155 = scmp.eq.s32.totalorder %s20, 7
      %p156 = por %p154, %p155
      %p157 = scmp.ne.s32.totalorder %s149, %s152
      %p158 = scmp.eq.s32.totalorder %s20, 0
      %p159 = por %p157, %p158
      %p160 = scmp.ne.s32.totalorder %s149, %s152
      %p161 = scmp.eq.s32.totalorder %s25, 7
      %p162 = por %p160, %p161
      %p163 = scmp.ne.s32.totalorder %s152, %s153
      %p164 = scmp.eq.s32.totalorder %s25, 0
      %p165 = por %p163, %p164
      %p166 = scmp.ne.s32.totalorder %s152, %s153
      %p167 = scmp.eq.s32.totalorder %s26, 7
      %p168 = por %p166, %p167
      %p170 = scmp.ne.s32.totalorder %s153, %s169
      %p171 = scmp.eq.s32.totalorder %s26, 0
      %p172 = por %p170, %p171
      %s173 = smul.u32 %s28, 2
      %s174 = ssub.s32 3, %s173
      %s175 = smul.u32 %s27, %s174
      %s176 = sadd.s32 %s28, %s175
      %s177 = smul.u32 %s35, 2
      %s178 = ssub.s32 3, %s177
      %s179 = smul.u32 %s39, %s178
      %s180 = sadd.s32 %s35, %s179
      %s181 = ssub.s32 %s176, %s180
      %s182 = ssub.s32 %s27, %s39
      %s183 = sor.u32 %s181, %s182
      %p184 = scmp.eq.s32.totalorder %s183, 0
      %s186 = sadd.s32 %s185, 1
      %s187 = scalar_select %p184, %s185, %s186
      %p190 = pneg %p184
      %p191 = scmp.eq.s32.totalorder %s20, 7
      %p192 = por %p190, %p191
      %p193 = scmp.ne.s32.totalorder %s185, %s188
      %p194 = scmp.eq.s32.totalorder %s20, 0
      %p195 = por %p193, %p194
      %p196 = scmp.ne.s32.totalorder %s185, %s188
      %p197 = scmp.eq.s32.totalorder %s25, 7
      %p198 = por %p196, %p197
      %p199 = scmp.ne.s32.totalorder %s188, %s189
      %p200 = scmp.eq.s32.totalorder %s25, 0
      %p201 = por %p199, %p200
      %p202 = scmp.ne.s32.totalorder %s188, %s189
      %p203 = scmp.eq.s32.totalorder %s26, 7
      %p204 = por %p202, %p203
      %p206 = scmp.ne.s32.totalorder %s189, %s205
      %p207 = scmp.eq.s32.totalorder %s26, 0
      %p208 = por %p206, %p207
      %p209 = scmp.le.s32.totalorder 1, %s20
      %p210 = scmp.lt.s32.totalorder %s20, 9
      %p211 = pnand %p209, %p210
      %p212 = pneg %p211
      // Predicated region
      $region9: #{tpu_custom_call.1} parent=5 // pred_check
        _
      $region10: #{tpu_custom_call.1} parent=5 // pred_check_branch
        %214 = sbr.rel (%p211) target = $region12
      $region11: #{tpu_custom_call.1} parent=5 // pred_region
        %s215 = ssub.s32 %s20, 1
        // Predicated region
        $region13: #{tpu_custom_call.1} parent=11 // pred_check
          %p216 = pneg %p53
        $region14: #{tpu_custom_call.1} parent=11 // pred_check_branch
          %218 = sbr.rel (%p216) target = $region16
        $region15: #{tpu_custom_call.1} parent=11 // pred_region
          _
        $region16: #{tpu_custom_call.1} parent=11 // pred_fallthru
          _
      $region12: #{tpu_custom_call.1} parent=5 // pred_fallthru
        _
      %p219 = scmp.lt.s32.totalorder %s20, 8
      // Predicated region
      $region17: #{tpu_custom_call.1} parent=5 // pred_check
        %p220 = pneg %p219
      $region18: #{tpu_custom_call.1} parent=5 // pred_check_branch
        %222 = sbr.rel (%p220) target = $region20
      $region19: #{tpu_custom_call.1} parent=5 // pred_region
        // Predicated region
        $region21: #{tpu_custom_call.1} parent=19 // pred_check
          %p223 = pneg %p81
        $region22: #{tpu_custom_call.1} parent=19 // pred_check_branch
          %225 = sbr.rel (%p223) target = $region24
        $region23: #{tpu_custom_call.1} parent=19 // pred_region
          %s226 = sand.u32 %s71, 1
          %s227 = scalar_lea.sflag [#allocation6], %s226
          %s228 = sand.u32 %s71, 1
          %s229 = smul.addr %s228, 32
          %s230 = scalar_lea.vmem [#allocation5], %s229
          %s231 = smul.u32 %s28, 2
          %s232 = ssub.s32 3, %s231
          %s233 = smul.u32 %s27, %s232
          %s234 = sadd.s32 %s28, %s233
          %236 = vsyncadd %s227, 0
          %s237 = smul.addr %s234, 4
          %s238 = smul.addr %s237, 8
          %s239 = scalar_lea.hbm %s1, %s238
          %s240 = sshll.u32 %s239, 4
          %s241 = int_to_ptr.hbm [resolvable:$true] %s240
          %s242 = sshll.u32 %s230, 4
          %s243 = int_to_ptr.vmem [resolvable:$true] %s242
          %248 = dma.hbm_to_vmem [thread:$0]  %s241, 512, %s243, %s227, 128, 128, 8
        $region24: #{tpu_custom_call.1} parent=19 // pred_fallthru
          _
        // Predicated region
        $region25: #{tpu_custom_call.1} parent=19 // pred_check
          %p249 = pneg %p107
        $region26: #{tpu_custom_call.1} parent=19 // pred_check_branch
          %251 = sbr.rel (%p249) target = $region28
        $region27: #{tpu_custom_call.1} parent=19 // pred_region
          %s252 = sand.u32 %s20, 1
          %s253 = scalar_lea.sflag [#allocation9], %s252
          %s254 = sand.u32 %s97, 1
          %s255 = smul.addr %s254, 320
          %s256 = scalar_lea.vmem [#allocation8], %s255
          %258 = vsyncadd %s253, 0
          %s259 = smul.addr %s27, 40
          %s260 = smul.addr %s259, 8
          %s261 = scalar_lea.hbm %s2, %s260
          %s262 = sshll.u32 %s261, 4
          %s263 = int_to_ptr.hbm [resolvable:$true] %s262
          %s264 = sshll.u32 %s256, 4
          %s265 = int_to_ptr.vmem [resolvable:$true] %s264
          %270 = dma.hbm_to_vmem [thread:$0]  %s263, 5120, %s265, %s253, 512, 512, 32
        $region28: #{tpu_custom_call.1} parent=19 // pred_fallthru
          _
        // Predicated region
        $region29: #{tpu_custom_call.1} parent=19 // pred_check
          %p271 = pneg %p133
        $region30: #{tpu_custom_call.1} parent=19 // pred_check_branch
          %273 = sbr.rel (%p271) target = $region32
        $region31: #{tpu_custom_call.1} parent=19 // pred_region
          %s274 = sand.u32 %s20, 1
          %s275 = scalar_lea.sflag [#allocation9], %s274
          %s276 = sand.u32 %s123, 1
          %s277 = smul.addr %s276, 512
          %s278 = scalar_lea.vmem [#allocation10], %s277
          %280 = vsyncadd %s275, 0
          %s281 = smul.addr %s27, 64
          %s282 = smul.addr %s281, 8
          %s283 = scalar_lea.hbm %s3, %s282
          %s284 = sshll.u32 %s283, 4
          %s285 = int_to_ptr.hbm [resolvable:$true] %s284
          %s286 = sshll.u32 %s278, 4
          %s287 = int_to_ptr.vmem [resolvable:$true] %s286
          %292 = dma.hbm_to_vmem [thread:$0]  %s285, 8192, %s287, %s275, 512, 512, 32
        $region32: #{tpu_custom_call.1} parent=19 // pred_fallthru
          _
        // Predicated region
        $region33: #{tpu_custom_call.1} parent=19 // pred_check
          %p293 = pneg %p159
        $region34: #{tpu_custom_call.1} parent=19 // pred_check_branch
          %295 = sbr.rel (%p293) target = $region36
        $region35: #{tpu_custom_call.1} parent=19 // pred_region
          %p296 = scmp.lt.s32.totalorder %s27, 1
          %s297 = scalar_select %p296, %s27, 1
          %s298 = smul.addr %s297, 4
          %s299 = scalar_lea.vmem %s4, %s298
        $region36: #{tpu_custom_call.1} parent=19 // pred_fallthru
          _
      $region20: #{tpu_custom_call.1} parent=5 // pred_fallthru
        _
      %p300 = scmp.le.s32.totalorder 1, %s20
      %p301 = scmp.lt.s32.totalorder %s20, 9
      %p302 = pnand %p300, %p301
      %p303 = pneg %p302
      // Predicated region
      $region37: #{tpu_custom_call.1} parent=5 // pred_check
        _
      $region38: #{tpu_custom_call.1} parent=5 // pred_check_branch
        %305 = sbr.rel (%p302) target = $region40
      $region39: #{tpu_custom_call.1} parent=5 // pred_region
        %s306 = ssub.s32 %s20, 1
        %s307 = sand.u32 %s74, 1
        %s308 = scalar_lea.sflag [#allocation6], %s307
        %s309 = sand.u32 %s74, 1
        %s310 = smul.addr %s309, 32
        %s311 = scalar_lea.vmem [#allocation5], %s310
        // Predicated region
        $region41: #{tpu_custom_call.1} parent=39 // pred_check
          %p312 = pneg %p87
        $region42: #{tpu_custom_call.1} parent=39 // pred_check_branch
          %314 = sbr.rel (%p312) target = $region44
        $region43: #{tpu_custom_call.1} parent=39 // pred_region
          %316 = dma.done %s308, 512
        $region44: #{tpu_custom_call.1} parent=39 // pred_fallthru
          _
        %s317 = sand.u32 %s25, 1
        %s318 = scalar_lea.sflag [#allocation9], %s317
        %s319 = sand.u32 %s100, 1
        %s320 = smul.addr %s319, 320
        %s321 = scalar_lea.vmem [#allocation8], %s320
        // Predicated region
        $region45: #{tpu_custom_call.1} parent=39 // pred_check
          %p322 = pneg %p113
        $region46: #{tpu_custom_call.1} parent=39 // pred_check_branch
          %324 = sbr.rel (%p322) target = $region48
        $region47: #{tpu_custom_call.1} parent=39 // pred_region
          %326 = dma.done %s318, 5120
        $region48: #{tpu_custom_call.1} parent=39 // pred_fallthru
          _
        %s327 = sand.u32 %s25, 1
        %s328 = scalar_lea.sflag [#allocation9], %s327
        %s329 = sand.u32 %s126, 1
        %s330 = smul.addr %s329, 512
        %s331 = scalar_lea.vmem [#allocation10], %s330
        // Predicated region
        $region49: #{tpu_custom_call.1} parent=39 // pred_check
          %p332 = pneg %p139
        $region50: #{tpu_custom_call.1} parent=39 // pred_check_branch
          %334 = sbr.rel (%p332) target = $region52
        $region51: #{tpu_custom_call.1} parent=39 // pred_region
          %336 = dma.done %s328, 8192
        $region52: #{tpu_custom_call.1} parent=39 // pred_fallthru
          _
        %p337 = pneg %p53
        %p338 = pneg %p50
        %s339 = sand.u32 %s74, 1
        %s340 = scalar_lea.sflag [#allocation6], %s339
        %s341 = sand.u32 %s74, 1
        %s342 = smul.addr %s341, 32
        %s343 = scalar_lea.vmem [#allocation5], %s342
        %p344 = pneg %p87
        %p345 = pneg %p84
        %s346 = sand.u32 %s25, 1
        %s347 = scalar_lea.sflag [#allocation9], %s346
        %s348 = sand.u32 %s100, 1
        %s349 = smul.addr %s348, 320
        %s350 = scalar_lea.vmem [#allocation8], %s349
        %p351 = pneg %p113
        %p352 = pneg %p110
        %s353 = sand.u32 %s25, 1
        %s354 = scalar_lea.sflag [#allocation9], %s353
        %s355 = sand.u32 %s126, 1
        %s356 = smul.addr %s355, 512
        %s357 = scalar_lea.vmem [#allocation10], %s356
        %p358 = pneg %p139
        %p359 = pneg %p136
        %p360 = scmp.lt.s32.totalorder %s29, 1
        %s361 = scalar_select %p360, %s29, 1
        %s362 = smul.addr %s361, 4
        %s363 = scalar_lea.vmem %s4, %s362
        %p364 = pneg %p165
        %p365 = pneg %p162
        %p366 = pneg %p201
        %p367 = pneg %p198
        %s368 = sand.u32 %s188, 1
        %s369 = scalar_lea.sflag [#allocation7], %s368
        %s370 = sand.u32 %s188, 1
        %s371 = smul.addr %s370, 32
        %s372 = scalar_lea.vmem [#allocation11], %s371
        %s373 = smul.u32 %s30, 2
        %s374 = ssub.s32 3, %s373
        %s375 = smul.u32 %s29, %s374
        %s376 = sadd.s32 %s30, %s375
        %p377 = scmp.lt.s32.totalorder %s29, 1
        %s378 = scalar_select %p377, %s29, 1
        %s379 = smul.addr %s378, 4
        %s380 = scalar_lea.vmem %s4, %s379
        %s381 = smul.u32 %s30, 2
        %s382 = ssub.s32 3, %s381
        %s383 = smul.u32 %s29, %s382
        %s384 = sadd.s32 %s30, %s383
        %s385 = smul.u32 4, %s384
        %p386 = scmp.eq.s32.totalorder %s30, 0
        // Predicated region
        $region53: #{tpu_custom_call.1} parent=39 // pred_check
          %p387 = pneg %p386
        $region54: #{tpu_custom_call.1} parent=39 // pred_check_branch
          %389 = sbr.rel (%p387) target = $region56
        $region55: #{tpu_custom_call.1} parent=39 // pred_region
          %390 = vst [vmem:[#allocation2] sm:$0xff] 0.0
          %391 = vst [vmem:[#allocation3] sm:$0xff] 0.0
        $region56: #{tpu_custom_call.1} parent=39 // pred_fallthru
          _
        %v392 = vld [vmem:[%s311] sm:$0xff]
        %v393 = vld [vmem:[%s311 + $0x8] sm:$0xff]
        %v394 = vld [vmem:[%s311 + $0x10] sm:$0xff]
        %v395 = vld [vmem:[%s311 + $0x18] sm:$0xff]
        %v396 = vld [vmem:[%s321] sm:$0xff]
        %v397 = vld [vmem:[%s321 + $0x8] sm:$0xff]
        %v398 = vld [vmem:[%s321 + $0x10] sm:$0xff]
        %v399 = vld [vmem:[%s321 + $0x18] sm:$0xff]
        %v400 = vld [vmem:[%s321 + $0x20] sm:$0xff]
        %v401 = vld [vmem:[%s321 + $0x28] sm:$0xff]
        %v402 = vld [vmem:[%s321 + $0x30] sm:$0xff]
        %v403 = vld [vmem:[%s321 + $0x38] sm:$0xff]
        %v404 = vld [vmem:[%s321 + $0x40] sm:$0xff]
        %v405 = vld [vmem:[%s321 + $0x48] sm:$0xff]
        %v406 = vld [vmem:[%s321 + $0x50] sm:$0xff]
        %v407 = vld [vmem:[%s321 + $0x58] sm:$0xff]
        %v408 = vld [vmem:[%s321 + $0x60] sm:$0xff]
        %v409 = vld [vmem:[%s321 + $0x68] sm:$0xff]
        %v410 = vld [vmem:[%s321 + $0x70] sm:$0xff]
        %v411 = vld [vmem:[%s321 + $0x78] sm:$0xff]
        %v412 = vld [vmem:[%s321 + $0x80] sm:$0xff]
        %v413 = vld [vmem:[%s321 + $0x88] sm:$0xff]
        %v414 = vld [vmem:[%s321 + $0x90] sm:$0xff]
        %v415 = vld [vmem:[%s321 + $0x98] sm:$0xff]
        %v416 = vld [vmem:[%s321 + $0xa0] sm:$0xff]
        %v417 = vld [vmem:[%s321 + $0xa8] sm:$0xff]
        %v418 = vld [vmem:[%s321 + $0xb0] sm:$0xff]
        %v419 = vld [vmem:[%s321 + $0xb8] sm:$0xff]
        %v420 = vld [vmem:[%s321 + $0xc0] sm:$0xff]
        %v421 = vld [vmem:[%s321 + $0xc8] sm:$0xff]
        %v422 = vld [vmem:[%s321 + $0xd0] sm:$0xff]
        %v423 = vld [vmem:[%s321 + $0xd8] sm:$0xff]
        %v424 = vld [vmem:[%s321 + $0xe0] sm:$0xff]
        %v425 = vld [vmem:[%s321 + $0xe8] sm:$0xff]
        %v426 = vld [vmem:[%s321 + $0xf0] sm:$0xff]
        %v427 = vld [vmem:[%s321 + $0xf8] sm:$0xff]
        %v428 = vld [vmem:[%s321 + $0x100] sm:$0xff]
        %v429 = vld [vmem:[%s321 + $0x108] sm:$0xff]
        %v430 = vld [vmem:[%s321 + $0x110] sm:$0xff]
        %v431 = vld [vmem:[%s321 + $0x118] sm:$0xff]
        %v432 = vld [vmem:[%s321 + $0x120] sm:$0xff]
        %v433 = vld [vmem:[%s321 + $0x128] sm:$0xff]
        %v434 = vld [vmem:[%s321 + $0x130] sm:$0xff]
        %v435 = vld [vmem:[%s321 + $0x138] sm:$0xff]
        %vm436 = vcmask 654336
        %v438 = vsel %vm436, %v392, 0
        %v441 = vsel %vm436, %v393, 0
        %v444 = vsel %vm436, %v394, 0
        %v447 = vsel %vm436, %v395, 0
        %449 = vmatpush.msra.mxu0 0.0
        %450 = vmatpush.msra.mxu0 0.0
        %451 = vmatpush.msra.mxu0 0.0
        %452 = vmatpush.msra.mxu0 0.0
        %453 = vmatpush.msra.mxu0 0.0
        %454 = vmatpush.msra.mxu0 0.0
        %455 = vmatpush.msra.mxu0 %v432
        %456 = vmatpush.msra.mxu0 %v428
        %457 = vmatpush.msra.mxu0 %v424
        %458 = vmatpush.msra.mxu0 %v420
        %459 = vmatpush.msra.mxu0 %v416
        %460 = vmatpush.msra.mxu0 %v412
        %461 = vmatpush.msra.mxu0 %v408
        %462 = vmatpush.msra.mxu0 %v404
        %463 = vmatpush.msra.mxu0 %v400
        %464 = vmatpush.msra.mxu0 %v396
        %465 = vmatmul.f32.gmra.mxu0 %v438
        %v466 = vpop.f32.mrf.mxu0
        %v467 = vadd.f32 0.0, %v466
        %468 = vmatmul.f32.gmra.mxu0 %v441
        %v469 = vpop.f32.mrf.mxu0
        %v470 = vadd.f32 0.0, %v469
        %471 = vmatmul.f32.gmra.mxu0 %v444
        %v472 = vpop.f32.mrf.mxu0
        %v473 = vadd.f32 0.0, %v472
        %474 = vmatmul.f32.gmra.mxu0 %v447
        %v475 = vpop.f32.mrf.mxu0
        %v476 = vadd.f32 0.0, %v475
        %477 = vdwg.mxu0
        %478 = vmatpush.msra.mxu0 0.0
        %479 = vmatpush.msra.mxu0 0.0
        %480 = vmatpush.msra.mxu0 0.0
        %481 = vmatpush.msra.mxu0 0.0
        %482 = vmatpush.msra.mxu0 0.0
        %483 = vmatpush.msra.mxu0 0.0
        %484 = vmatpush.msra.mxu0 %v433
        %485 = vmatpush.msra.mxu0 %v429
        %486 = vmatpush.msra.mxu0 %v425
        %487 = vmatpush.msra.mxu0 %v421
        %488 = vmatpush.msra.mxu0 %v417
        %489 = vmatpush.msra.mxu0 %v413
        %490 = vmatpush.msra.mxu0 %v409
        %491 = vmatpush.msra.mxu0 %v405
        %492 = vmatpush.msra.mxu0 %v401
        %493 = vmatpush.msra.mxu0 %v397
        %494 = vmatmul.f32.gmra.mxu0 %v438
        %v495 = vpop.f32.mrf.mxu0
        %v496 = vadd.f32 0.0, %v495
        %497 = vmatmul.f32.gmra.mxu0 %v441
        %v498 = vpop.f32.mrf.mxu0
        %v499 = vadd.f32 0.0, %v498
        %500 = vmatmul.f32.gmra.mxu0 %v444
        %v501 = vpop.f32.mrf.mxu0
        %v502 = vadd.f32 0.0, %v501
        %503 = vmatmul.f32.gmra.mxu0 %v447
        %v504 = vpop.f32.mrf.mxu0
        %v505 = vadd.f32 0.0, %v504
        %506 = vdwg.mxu0
        %507 = vmatpush.msra.mxu0 0.0
        %508 = vmatpush.msra.mxu0 0.0
        %509 = vmatpush.msra.mxu0 0.0
        %510 = vmatpush.msra.mxu0 0.0
        %511 = vmatpush.msra.mxu0 0.0
        %512 = vmatpush.msra.mxu0 0.0
        %513 = vmatpush.msra.mxu0 %v434
        %514 = vmatpush.msra.mxu0 %v430
        %515 = vmatpush.msra.mxu0 %v426
        %516 = vmatpush.msra.mxu0 %v422
        %517 = vmatpush.msra.mxu0 %v418
        %518 = vmatpush.msra.mxu0 %v414
        %519 = vmatpush.msra.mxu0 %v410
        %520 = vmatpush.msra.mxu0 %v406
        %521 = vmatpush.msra.mxu0 %v402
        %522 = vmatpush.msra.mxu0 %v398
        %523 = vmatmul.f32.gmra.mxu0 %v438
        %v524 = vpop.f32.mrf.mxu0
        %v525 = vadd.f32 0.0, %v524
        %526 = vmatmul.f32.gmra.mxu0 %v441
        %v527 = vpop.f32.mrf.mxu0
        %v528 = vadd.f32 0.0, %v527
        %529 = vmatmul.f32.gmra.mxu0 %v444
        %v530 = vpop.f32.mrf.mxu0
        %v531 = vadd.f32 0.0, %v530
        %532 = vmatmul.f32.gmra.mxu0 %v447
        %v533 = vpop.f32.mrf.mxu0
        %v534 = vadd.f32 0.0, %v533
        %535 = vdwg.mxu0
        %536 = vmatpush.msra.mxu0 0.0
        %537 = vmatpush.msra.mxu0 0.0
        %538 = vmatpush.msra.mxu0 0.0
        %539 = vmatpush.msra.mxu0 0.0
        %540 = vmatpush.msra.mxu0 0.0
        %541 = vmatpush.msra.mxu0 0.0
        %542 = vmatpush.msra.mxu0 %v435
        %543 = vmatpush.msra.mxu0 %v431
        %544 = vmatpush.msra.mxu0 %v427
        %545 = vmatpush.msra.mxu0 %v423
        %546 = vmatpush.msra.mxu0 %v419
        %547 = vmatpush.msra.mxu0 %v415
        %548 = vmatpush.msra.mxu0 %v411
        %549 = vmatpush.msra.mxu0 %v407
        %550 = vmatpush.msra.mxu0 %v403
        %551 = vmatpush.msra.mxu0 %v399
        %552 = vmatmul.f32.gmra.mxu0 %v438
        %v553 = vpop.f32.mrf.mxu0
        %v554 = vadd.f32 0.0, %v553
        %555 = vmatmul.f32.gmra.mxu0 %v441
        %v556 = vpop.f32.mrf.mxu0
        %v557 = vadd.f32 0.0, %v556
        %558 = vmatmul.f32.gmra.mxu0 %v444
        %v559 = vpop.f32.mrf.mxu0
        %v560 = vadd.f32 0.0, %v559
        %561 = vmatmul.f32.gmra.mxu0 %v447
        %v562 = vpop.f32.mrf.mxu0
        %v563 = vadd.f32 0.0, %v562
        %564 = vdwg.mxu0
        %565 = vst [vmem:[#allocation4] sm:$0xff] %v467
        %566 = vst [vmem:[#allocation4 + $0x8] sm:$0xff] %v496
        %567 = vst [vmem:[#allocation4 + $0x10] sm:$0xff] %v525
        %568 = vst [vmem:[#allocation4 + $0x18] sm:$0xff] %v554
        %569 = vst [vmem:[#allocation4 + $0x20] sm:$0xff] %v470
        %570 = vst [vmem:[#allocation4 + $0x28] sm:$0xff] %v499
        %571 = vst [vmem:[#allocation4 + $0x30] sm:$0xff] %v528
        %572 = vst [vmem:[#allocation4 + $0x38] sm:$0xff] %v557
        %573 = vst [vmem:[#allocation4 + $0x40] sm:$0xff] %v473
        %574 = vst [vmem:[#allocation4 + $0x48] sm:$0xff] %v502
        %575 = vst [vmem:[#allocation4 + $0x50] sm:$0xff] %v531
        %576 = vst [vmem:[#allocation4 + $0x58] sm:$0xff] %v560
        %577 = vst [vmem:[#allocation4 + $0x60] sm:$0xff] %v476
        %578 = vst [vmem:[#allocation4 + $0x68] sm:$0xff] %v505
        %579 = vst [vmem:[#allocation4 + $0x70] sm:$0xff] %v534
        %580 = vst [vmem:[#allocation4 + $0x78] sm:$0xff] %v563
        %v581 = vld [vmem:[%s0] sm:$0xff]
        %v582 = vld [vmem:[%s380] sm:$0xf]
        %s583 = smul.u32 %s30, 2
        %s584 = ssub.s32 3, %s583
        %s585 = smul.u32 %s29, %s584
        %s586 = sadd.s32 %s30, %s585
        %s587 = smul.u32 %s29, 3
        %s588 = smul.u32 %s586, 4
        %s589 = sadd.s32 %s588, %s587
        %v590 = vld [vmem:[#allocation2] sm:$0xff]
        %v591 = vld [vmem:[%s331] sm:$0xff]
        %v592 = vld [vmem:[%s331 + $0x8] sm:$0xff]
        %v593 = vld [vmem:[%s331 + $0x10] sm:$0xff]
        %v594 = vld [vmem:[%s331 + $0x18] sm:$0xff]
        %v595 = vld [vmem:[%s331 + $0x20] sm:$0xff]
        %v596 = vld [vmem:[%s331 + $0x28] sm:$0xff]
        %v597 = vld [vmem:[%s331 + $0x30] sm:$0xff]
        %v598 = vld [vmem:[%s331 + $0x38] sm:$0xff]
        %v599 = vld [vmem:[%s331 + $0x40] sm:$0xff]
        %v600 = vld [vmem:[%s331 + $0x48] sm:$0xff]
        %v601 = vld [vmem:[%s331 + $0x50] sm:$0xff]
        %v602 = vld [vmem:[%s331 + $0x58] sm:$0xff]
        %v603 = vld [vmem:[%s331 + $0x60] sm:$0xff]
        %v604 = vld [vmem:[%s331 + $0x68] sm:$0xff]
        %v605 = vld [vmem:[%s331 + $0x70] sm:$0xff]
        %v606 = vld [vmem:[%s331 + $0x78] sm:$0xff]
        %v607 = vld [vmem:[%s331 + $0x80] sm:$0xff]
        %v608 = vld [vmem:[%s331 + $0x88] sm:$0xff]
        %v609 = vld [vmem:[%s331 + $0x90] sm:$0xff]
        %v610 = vld [vmem:[%s331 + $0x98] sm:$0xff]
        %v611 = vld [vmem:[%s331 + $0xa0] sm:$0xff]
        %v612 = vld [vmem:[%s331 + $0xa8] sm:$0xff]
        %v613 = vld [vmem:[%s331 + $0xb0] sm:$0xff]
        %v614 = vld [vmem:[%s331 + $0xb8] sm:$0xff]
        %v615 = vld [vmem:[%s331 + $0xc0] sm:$0xff]
        %v616 = vld [vmem:[%s331 + $0xc8] sm:$0xff]
        %v617 = vld [vmem:[%s331 + $0xd0] sm:$0xff]
        %v618 = vld [vmem:[%s331 + $0xd8] sm:$0xff]
        %v619 = vld [vmem:[%s331 + $0xe0] sm:$0xff]
        %v620 = vld [vmem:[%s331 + $0xe8] sm:$0xff]
        %v621 = vld [vmem:[%s331 + $0xf0] sm:$0xff]
        %v622 = vld [vmem:[%s331 + $0xf8] sm:$0xff]
        %v623 = vld [vmem:[%s331 + $0x100] sm:$0xff]
        %v624 = vld [vmem:[%s331 + $0x108] sm:$0xff]
        %v625 = vld [vmem:[%s331 + $0x110] sm:$0xff]
        %v626 = vld [vmem:[%s331 + $0x118] sm:$0xff]
        %v627 = vld [vmem:[%s331 + $0x120] sm:$0xff]
        %v628 = vld [vmem:[%s331 + $0x128] sm:$0xff]
        %v629 = vld [vmem:[%s331 + $0x130] sm:$0xff]
        %v630 = vld [vmem:[%s331 + $0x138] sm:$0xff]
        %v631 = vld [vmem:[%s331 + $0x140] sm:$0xff]
        %v632 = vld [vmem:[%s331 + $0x148] sm:$0xff]
        %v633 = vld [vmem:[%s331 + $0x150] sm:$0xff]
        %v634 = vld [vmem:[%s331 + $0x158] sm:$0xff]
        %v635 = vld [vmem:[%s331 + $0x160] sm:$0xff]
        %v636 = vld [vmem:[%s331 + $0x168] sm:$0xff]
        %v637 = vld [vmem:[%s331 + $0x170] sm:$0xff]
        %v638 = vld [vmem:[%s331 + $0x178] sm:$0xff]
        %v639 = vld [vmem:[%s331 + $0x180] sm:$0xff]
        %v640 = vld [vmem:[%s331 + $0x188] sm:$0xff]
        %v641 = vld [vmem:[%s331 + $0x190] sm:$0xff]
        %v642 = vld [vmem:[%s331 + $0x198] sm:$0xff]
        %v643 = vld [vmem:[%s331 + $0x1a0] sm:$0xff]
        %v644 = vld [vmem:[%s331 + $0x1a8] sm:$0xff]
        %v645 = vld [vmem:[%s331 + $0x1b0] sm:$0xff]
        %v646 = vld [vmem:[%s331 + $0x1b8] sm:$0xff]
        %v647 = vld [vmem:[%s331 + $0x1c0] sm:$0xff]
        %v648 = vld [vmem:[%s331 + $0x1c8] sm:$0xff]
        %v649 = vld [vmem:[%s331 + $0x1d0] sm:$0xff]
        %v650 = vld [vmem:[%s331 + $0x1d8] sm:$0xff]
        %v651 = vld [vmem:[%s331 + $0x1e0] sm:$0xff]
        %v652 = vld [vmem:[%s331 + $0x1e8] sm:$0xff]
        %v653 = vld [vmem:[%s331 + $0x1f0] sm:$0xff]
        %v654 = vld [vmem:[%s331 + $0x1f8] sm:$0xff]
        %655 = vmatpush.msra.mxu0 %v651
        %656 = vmatpush.msra.mxu0 %v647
        %657 = vmatpush.msra.mxu0 %v643
        %658 = vmatpush.msra.mxu0 %v639
        %659 = vmatpush.msra.mxu0 %v635
        %660 = vmatpush.msra.mxu0 %v631
        %661 = vmatpush.msra.mxu0 %v627
        %662 = vmatpush.msra.mxu0 %v623
        %663 = vmatpush.msra.mxu0 %v619
        %664 = vmatpush.msra.mxu0 %v615
        %665 = vmatpush.msra.mxu0 %v611
        %666 = vmatpush.msra.mxu0 %v607
        %667 = vmatpush.msra.mxu0 %v603
        %668 = vmatpush.msra.mxu0 %v599
        %669 = vmatpush.msra.mxu0 %v595
        %670 = vmatpush.msra.mxu0 %v591
        %671 = vmatmul.f32.gmra.mxu0 %v590
        %v672 = vpop.f32.mrf.mxu0
        %v673 = vadd.f32 0.0, %v672
        %674 = vdwg.mxu0
        %675 = vmatpush.msra.mxu0 %v652
        %676 = vmatpush.msra.mxu0 %v648
        %677 = vmatpush.msra.mxu0 %v644
        %678 = vmatpush.msra.mxu0 %v640
        %679 = vmatpush.msra.mxu0 %v636
        %680 = vmatpush.msra.mxu0 %v632
        %681 = vmatpush.msra.mxu0 %v628
        %682 = vmatpush.msra.mxu0 %v624
        %683 = vmatpush.msra.mxu0 %v620
        %684 = vmatpush.msra.mxu0 %v616
        %685 = vmatpush.msra.mxu0 %v612
        %686 = vmatpush.msra.mxu0 %v608
        %687 = vmatpush.msra.mxu0 %v604
        %688 = vmatpush.msra.mxu0 %v600
        %689 = vmatpush.msra.mxu0 %v596
        %690 = vmatpush.msra.mxu0 %v592
        %691 = vmatmul.f32.gmra.mxu0 %v590
        %v692 = vpop.f32.mrf.mxu0
        %v693 = vadd.f32 0.0, %v692
        %694 = vdwg.mxu0
        %695 = vmatpush.msra.mxu0 %v653
        %696 = vmatpush.msra.mxu0 %v649
        %697 = vmatpush.msra.mxu0 %v645
        %698 = vmatpush.msra.mxu0 %v641
        %699 = vmatpush.msra.mxu0 %v637
        %700 = vmatpush.msra.mxu0 %v633
        %701 = vmatpush.msra.mxu0 %v629
        %702 = vmatpush.msra.mxu0 %v625
        %703 = vmatpush.msra.mxu0 %v621
        %704 = vmatpush.msra.mxu0 %v617
        %705 = vmatpush.msra.mxu0 %v613
        %706 = vmatpush.msra.mxu0 %v609
        %707 = vmatpush.msra.mxu0 %v605
        %708 = vmatpush.msra.mxu0 %v601
        %709 = vmatpush.msra.mxu0 %v597
        %710 = vmatpush.msra.mxu0 %v593
        %711 = vmatmul.f32.gmra.mxu0 %v590
        %v712 = vpop.f32.mrf.mxu0
        %v713 = vadd.f32 0.0, %v712
        %714 = vdwg.mxu0
        %715 = vmatpush.msra.mxu0 %v654
        %716 = vmatpush.msra.mxu0 %v650
        %717 = vmatpush.msra.mxu0 %v646
        %718 = vmatpush.msra.mxu0 %v642
        %719 = vmatpush.msra.mxu0 %v638
        %720 = vmatpush.msra.mxu0 %v634
        %721 = vmatpush.msra.mxu0 %v630
        %722 = vmatpush.msra.mxu0 %v626
        %723 = vmatpush.msra.mxu0 %v622
        %724 = vmatpush.msra.mxu0 %v618
        %725 = vmatpush.msra.mxu0 %v614
        %726 = vmatpush.msra.mxu0 %v610
        %727 = vmatpush.msra.mxu0 %v606
        %728 = vmatpush.msra.mxu0 %v602
        %729 = vmatpush.msra.mxu0 %v598
        %730 = vmatpush.msra.mxu0 %v594
        %731 = vmatmul.f32.gmra.mxu0 %v590
        %v732 = vpop.f32.mrf.mxu0
        %v733 = vadd.f32 0.0, %v732
        %734 = vdwg.mxu0
        %s735 = smul.u32 %s29, 24
        %s736 = sshra.s32 %s735, 3
        %s737 = sand.u32 %s735, 7
        %s738 = smul.u32 %s736, 4
        %s739 = smul.addr %s738, 8
        %s740 = scalar_lea.vmem [#allocation4], %s739
        %v741 = vld [vmem:[%s740] sm:$0xff]
        %v742 = vld [vmem:[%s740 + $0x8] sm:$0xff]
        %v743 = vld [vmem:[%s740 + $0x10] sm:$0xff]
        %v744 = vld [vmem:[%s740 + $0x18] sm:$0xff]
        %v745 = vadd.f32 %v741, %v673
        %v746 = vadd.f32 %v742, %v693
        %v747 = vadd.f32 %v743, %v713
        %v748 = vadd.f32 %v744, %v733
        %v750 = vperm.slane %v582, 0
        %v751 = vperm.slane %v582, 1
        %v752 = vperm.slane %v582, 2
        %v753 = vperm.slane %v582, 3
        %v758 = vadd.f32 %v745, %v750
        %v759 = vadd.f32 %v746, %v751
        %v760 = vadd.f32 %v747, %v752
        %v761 = vadd.f32 %v748, %v753
        %v762 = vxor.u32 %v758, 2147483648
        %v763 = vmul.f32 %v762, 1.442695
        %v764 = vpow.pop %v763
        %v765 = vadd.f32 %v764, 1.0
        %v766 = vrcp.pop %v765
        %v767 = vmul.f32 %v765, %v766
        %v768 = vsub.f32 1.0, %v767
        %v769 = vmul.f32 %v766, %v768
        %v770 = vadd.f32 %v766, %v769
        %vm771 = vweird.f32 %v765
        %vm772 = vweird.f32 %v766
        %vm773 = vmor %vm771, %vm772
        %v774 = vsel %vm773, %v766, %v770
        %v775 = vand.u32 2147483647, %v765
        %vm776 = vcmp.eq.f32.partialorder %v775, 8.507059e+37
        %v777 = vand.u32 %v765, 2147483648
        %v778 = vor.u32 1.1754944e-38, %v777
        %v779 = vsel %vm776, %v778, %v774
        %v780 = vmul.f32 1.0, %v779
        %v781 = vxor.u32 %v759, 2147483648
        %v782 = vmul.f32 %v781, 1.442695
        %v783 = vpow.pop %v782
        %v784 = vadd.f32 %v783, 1.0
        %v785 = vrcp.pop %v784
        %v786 = vmul.f32 %v784, %v785
        %v787 = vsub.f32 1.0, %v786
        %v788 = vmul.f32 %v785, %v787
        %v789 = vadd.f32 %v785, %v788
        %vm790 = vweird.f32 %v784
        %vm791 = vweird.f32 %v785
        %vm792 = vmor %vm790, %vm791
        %v793 = vsel %vm792, %v785, %v789
        %v794 = vand.u32 2147483647, %v784
        %vm795 = vcmp.eq.f32.partialorder %v794, 8.507059e+37
        %v796 = vand.u32 %v784, 2147483648
        %v797 = vor.u32 1.1754944e-38, %v796
        %v798 = vsel %vm795, %v797, %v793
        %v799 = vmul.f32 1.0, %v798
        %v800 = vtanh.pop %v760
        %v801 = vxor.u32 %v761, 2147483648
        %v802 = vmul.f32 %v801, 1.442695
        %v803 = vpow.pop %v802
        %v804 = vadd.f32 %v803, 1.0
        %v805 = vrcp.pop %v804
        %v806 = vmul.f32 %v804, %v805
        %v807 = vsub.f32 1.0, %v806
        %v808 = vmul.f32 %v805, %v807
        %v809 = vadd.f32 %v805, %v808
        %vm810 = vweird.f32 %v804
        %vm811 = vweird.f32 %v805
        %vm812 = vmor %vm810, %vm811
        %v813 = vsel %vm812, %v805, %v809
        %v814 = vand.u32 2147483647, %v804
        %vm815 = vcmp.eq.f32.partialorder %v814, 8.507059e+37
        %v816 = vand.u32 %v804, 2147483648
        %v817 = vor.u32 1.1754944e-38, %v816
        %v818 = vsel %vm815, %v817, %v813
        %v819 = vmul.f32 1.0, %v818
        %v820 = vld [vmem:[#allocation3] sm:$0xff]
        %v821 = vmul.f32 %v799, %v820
        %v822 = vmul.f32 %v780, %v800
        %v823 = vadd.f32 %v821, %v822
        %v824 = vtanh.pop %v823
        %v825 = vmul.f32 %v819, %v824
        %v826 = vstv %s589
        %vm827 = vcmp.gt.s32.totalorder %v581, %v826
        %v828 = vsel %vm827, 1, 0
        %829 = vset.pattern.permute.xlu0 0
        %830 = vperm.xlu0 %829, %v828
        %v831 = vpop.permute.xlu0 %830
        %vm832 = vcmp.eq.s32.totalorder %v831, 1
        %v833 = vsel %vm832, %v825, %v590
        %834 = vst [vmem:[#allocation2] sm:$0xff] %v833
        %v835 = vld [vmem:[#allocation3] sm:$0xff]
        %v836 = vsel %vm832, %v823, %v835
        %837 = vst [vmem:[#allocation3] sm:$0xff] %v836
        %v838 = vsel %vm832, %v825, 0.0
        %s839 = smul.u32 %s587, 8
        %s840 = scalar_lea.vmem %s372, %s839 [#allocation11]
        %841 = vst [vmem:[%s840] sm:$0xff] %v838
        %s842 = sadd.s32 %s29, 1
        %s843 = sadd.s32 %s588, %s842
        %v844 = vld [vmem:[#allocation2] sm:$0xff]
        %v845 = vld [vmem:[%s331] sm:$0xff]
        %v846 = vld [vmem:[%s331 + $0x8] sm:$0xff]
        %v847 = vld [vmem:[%s331 + $0x10] sm:$0xff]
        %v848 = vld [vmem:[%s331 + $0x18] sm:$0xff]
        %v849 = vld [vmem:[%s331 + $0x20] sm:$0xff]
        %v850 = vld [vmem:[%s331 + $0x28] sm:$0xff]
        %v851 = vld [vmem:[%s331 + $0x30] sm:$0xff]
        %v852 = vld [vmem:[%s331 + $0x38] sm:$0xff]
        %v853 = vld [vmem:[%s331 + $0x40] sm:$0xff]
        %v854 = vld [vmem:[%s331 + $0x48] sm:$0xff]
        %v855 = vld [vmem:[%s331 + $0x50] sm:$0xff]
        %v856 = vld [vmem:[%s331 + $0x58] sm:$0xff]
        %v857 = vld [vmem:[%s331 + $0x60] sm:$0xff]
        %v858 = vld [vmem:[%s331 + $0x68] sm:$0xff]
        %v859 = vld [vmem:[%s331 + $0x70] sm:$0xff]
        %v860 = vld [vmem:[%s331 + $0x78] sm:$0xff]
        %v861 = vld [vmem:[%s331 + $0x80] sm:$0xff]
        %v862 = vld [vmem:[%s331 + $0x88] sm:$0xff]
        %v863 = vld [vmem:[%s331 + $0x90] sm:$0xff]
        %v864 = vld [vmem:[%s331 + $0x98] sm:$0xff]
        %v865 = vld [vmem:[%s331 + $0xa0] sm:$0xff]
        %v866 = vld [vmem:[%s331 + $0xa8] sm:$0xff]
        %v867 = vld [vmem:[%s331 + $0xb0] sm:$0xff]
        %v868 = vld [vmem:[%s331 + $0xb8] sm:$0xff]
        %v869 = vld [vmem:[%s331 + $0xc0] sm:$0xff]
        %v870 = vld [vmem:[%s331 + $0xc8] sm:$0xff]
        %v871 = vld [vmem:[%s331 + $0xd0] sm:$0xff]
        %v872 = vld [vmem:[%s331 + $0xd8] sm:$0xff]
        %v873 = vld [vmem:[%s331 + $0xe0] sm:$0xff]
        %v874 = vld [vmem:[%s331 + $0xe8] sm:$0xff]
        %v875 = vld [vmem:[%s331 + $0xf0] sm:$0xff]
        %v876 = vld [vmem:[%s331 + $0xf8] sm:$0xff]
        %v877 = vld [vmem:[%s331 + $0x100] sm:$0xff]
        %v878 = vld [vmem:[%s331 + $0x108] sm:$0xff]
        %v879 = vld [vmem:[%s331 + $0x110] sm:$0xff]
        %v880 = vld [vmem:[%s331 + $0x118] sm:$0xff]
        %v881 = vld [vmem:[%s331 + $0x120] sm:$0xff]
        %v882 = vld [vmem:[%s331 + $0x128] sm:$0xff]
        %v883 = vld [vmem:[%s331 + $0x130] sm:$0xff]
        %v884 = vld [vmem:[%s331 + $0x138] sm:$0xff]
        %v885 = vld [vmem:[%s331 + $0x140] sm:$0xff]
        %v886 = vld [vmem:[%s331 + $0x148] sm:$0xff]
        %v887 = vld [vmem:[%s331 + $0x150] sm:$0xff]
        %v888 = vld [vmem:[%s331 + $0x158] sm:$0xff]
        %v889 = vld [vmem:[%s331 + $0x160] sm:$0xff]
        %v890 = vld [vmem:[%s331 + $0x168] sm:$0xff]
        %v891 = vld [vmem:[%s331 + $0x170] sm:$0xff]
        %v892 = vld [vmem:[%s331 + $0x178] sm:$0xff]
        %v893 = vld [vmem:[%s331 + $0x180] sm:$0xff]
        %v894 = vld [vmem:[%s331 + $0x188] sm:$0xff]
        %v895 = vld [vmem:[%s331 + $0x190] sm:$0xff]
        %v896 = vld [vmem:[%s331 + $0x198] sm:$0xff]
        %v897 = vld [vmem:[%s331 + $0x1a0] sm:$0xff]
        %v898 = vld [vmem:[%s331 + $0x1a8] sm:$0xff]
        %v899 = vld [vmem:[%s331 + $0x1b0] sm:$0xff]
        %v900 = vld [vmem:[%s331 + $0x1b8] sm:$0xff]
        %v901 = vld [vmem:[%s331 + $0x1c0] sm:$0xff]
        %v902 = vld [vmem:[%s331 + $0x1c8] sm:$0xff]
        %v903 = vld [vmem:[%s331 + $0x1d0] sm:$0xff]
        %v904 = vld [vmem:[%s331 + $0x1d8] sm:$0xff]
        %v905 = vld [vmem:[%s331 + $0x1e0] sm:$0xff]
        %v906 = vld [vmem:[%s331 + $0x1e8] sm:$0xff]
        %v907 = vld [vmem:[%s331 + $0x1f0] sm:$0xff]
        %v908 = vld [vmem:[%s331 + $0x1f8] sm:$0xff]
        %909 = vmatpush.msra.mxu0 %v905
        %910 = vmatpush.msra.mxu0 %v901
        %911 = vmatpush.msra.mxu0 %v897
        %912 = vmatpush.msra.mxu0 %v893
        %913 = vmatpush.msra.mxu0 %v889
        %914 = vmatpush.msra.mxu0 %v885
        %915 = vmatpush.msra.mxu0 %v881
        %916 = vmatpush.msra.mxu0 %v877
        %917 = vmatpush.msra.mxu0 %v873
        %918 = vmatpush.msra.mxu0 %v869
        %919 = vmatpush.msra.mxu0 %v865
        %920 = vmatpush.msra.mxu0 %v861
        %921 = vmatpush.msra.mxu0 %v857
        %922 = vmatpush.msra.mxu0 %v853
        %923 = vmatpush.msra.mxu0 %v849
        %924 = vmatpush.msra.mxu0 %v845
        %925 = vmatmul.f32.gmra.mxu0 %v844
        %v926 = vpop.f32.mrf.mxu0
        %v927 = vadd.f32 0.0, %v926
        %928 = vdwg.mxu0
        %929 = vmatpush.msra.mxu0 %v906
        %930 = vmatpush.msra.mxu0 %v902
        %931 = vmatpush.msra.mxu0 %v898
        %932 = vmatpush.msra.mxu0 %v894
        %933 = vmatpush.msra.mxu0 %v890
        %934 = vmatpush.msra.mxu0 %v886
        %935 = vmatpush.msra.mxu0 %v882
        %936 = vmatpush.msra.mxu0 %v878
        %937 = vmatpush.msra.mxu0 %v874
        %938 = vmatpush.msra.mxu0 %v870
        %939 = vmatpush.msra.mxu0 %v866
        %940 = vmatpush.msra.mxu0 %v862
        %941 = vmatpush.msra.mxu0 %v858
        %942 = vmatpush.msra.mxu0 %v854
        %943 = vmatpush.msra.mxu0 %v850
        %944 = vmatpush.msra.mxu0 %v846
        %945 = vmatmul.f32.gmra.mxu0 %v844
        %v946 = vpop.f32.mrf.mxu0
        %v947 = vadd.f32 0.0, %v946
        %948 = vdwg.mxu0
        %949 = vmatpush.msra.mxu0 %v907
        %950 = vmatpush.msra.mxu0 %v903
        %951 = vmatpush.msra.mxu0 %v899
        %952 = vmatpush.msra.mxu0 %v895
        %953 = vmatpush.msra.mxu0 %v891
        %954 = vmatpush.msra.mxu0 %v887
        %955 = vmatpush.msra.mxu0 %v883
        %956 = vmatpush.msra.mxu0 %v879
        %957 = vmatpush.msra.mxu0 %v875
        %958 = vmatpush.msra.mxu0 %v871
        %959 = vmatpush.msra.mxu0 %v867
        %960 = vmatpush.msra.mxu0 %v863
        %961 = vmatpush.msra.mxu0 %v859
        %962 = vmatpush.msra.mxu0 %v855
        %963 = vmatpush.msra.mxu0 %v851
        %964 = vmatpush.msra.mxu0 %v847
        %965 = vmatmul.f32.gmra.mxu0 %v844
        %v966 = vpop.f32.mrf.mxu0
        %v967 = vadd.f32 0.0, %v966
        %968 = vdwg.mxu0
        %969 = vmatpush.msra.mxu0 %v908
        %970 = vmatpush.msra.mxu0 %v904
        %971 = vmatpush.msra.mxu0 %v900
        %972 = vmatpush.msra.mxu0 %v896
        %973 = vmatpush.msra.mxu0 %v892
        %974 = vmatpush.msra.mxu0 %v888
        %975 = vmatpush.msra.mxu0 %v884
        %976 = vmatpush.msra.mxu0 %v880
        %977 = vmatpush.msra.mxu0 %v876
        %978 = vmatpush.msra.mxu0 %v872
        %979 = vmatpush.msra.mxu0 %v868
        %980 = vmatpush.msra.mxu0 %v864
        %981 = vmatpush.msra.mxu0 %v860
        %982 = vmatpush.msra.mxu0 %v856
        %983 = vmatpush.msra.mxu0 %v852
        %984 = vmatpush.msra.mxu0 %v848
        %985 = vmatmul.f32.gmra.mxu0 %v844
        %v986 = vpop.f32.mrf.mxu0
        %v987 = vadd.f32 0.0, %v986
        %988 = vdwg.mxu0
        %s989 = smul.u32 %s842, 8
        %s990 = sshra.s32 %s989, 3
        %s991 = sand.u32 %s989, 7
        %s992 = smul.u32 %s990, 4
        %s993 = smul.addr %s992, 8
        %s994 = scalar_lea.vmem [#allocation4], %s993
        %v995 = vld [vmem:[%s994] sm:$0xff]
        %v996 = vld [vmem:[%s994 + $0x8] sm:$0xff]
        %v997 = vld [vmem:[%s994 + $0x10] sm:$0xff]
        %v998 = vld [vmem:[%s994 + $0x18] sm:$0xff]
        %v999 = vadd.f32 %v995, %v927
        %v1000 = vadd.f32 %v996, %v947
        %v1001 = vadd.f32 %v997, %v967
        %v1002 = vadd.f32 %v998, %v987
        %v1003 = vadd.f32 %v999, %v750
        %v1004 = vadd.f32 %v1000, %v751
        %v1005 = vadd.f32 %v1001, %v752
        %v1006 = vadd.f32 %v1002, %v753
        %v1007 = vxor.u32 %v1003, 2147483648
        %v1008 = vmul.f32 %v1007, 1.442695
        %v1009 = vpow.pop %v1008
        %v1010 = vadd.f32 %v1009, 1.0
        %v1011 = vrcp.pop %v1010
        %v1012 = vmul.f32 %v1010, %v1011
        %v1013 = vsub.f32 1.0, %v1012
        %v1014 = vmul.f32 %v1011, %v1013
        %v1015 = vadd.f32 %v1011, %v1014
        %vm1016 = vweird.f32 %v1010
        %vm1017 = vweird.f32 %v1011
        %vm1018 = vmor %vm1016, %vm1017
        %v1019 = vsel %vm1018, %v1011, %v1015
        %v1020 = vand.u32 2147483647, %v1010
        %vm1021 = vcmp.eq.f32.partialorder %v1020, 8.507059e+37
        %v1022 = vand.u32 %v1010, 2147483648
        %v1023 = vor.u32 1.1754944e-38, %v1022
        %v1024 = vsel %vm1021, %v1023, %v1019
        %v1025 = vmul.f32 1.0, %v1024
        %v1026 = vxor.u32 %v1004, 2147483648
        %v1027 = vmul.f32 %v1026, 1.442695
        %v1028 = vpow.pop %v1027
        %v1029 = vadd.f32 %v1028, 1.0
        %v1030 = vrcp.pop %v1029
        %v1031 = vmul.f32 %v1029, %v1030
        %v1032 = vsub.f32 1.0, %v1031
        %v1033 = vmul.f32 %v1030, %v1032
        %v1034 = vadd.f32 %v1030, %v1033
        %vm1035 = vweird.f32 %v1029
        %vm1036 = vweird.f32 %v1030
        %vm1037 = vmor %vm1035, %vm1036
        %v1038 = vsel %vm1037, %v1030, %v1034
        %v1039 = vand.u32 2147483647, %v1029
        %vm1040 = vcmp.eq.f32.partialorder %v1039, 8.507059e+37
        %v1041 = vand.u32 %v1029, 2147483648
        %v1042 = vor.u32 1.1754944e-38, %v1041
        %v1043 = vsel %vm1040, %v1042, %v1038
        %v1044 = vmul.f32 1.0, %v1043
        %v1045 = vtanh.pop %v1005
        %v1046 = vxor.u32 %v1006, 2147483648
        %v1047 = vmul.f32 %v1046, 1.442695
        %v1048 = vpow.pop %v1047
        %v1049 = vadd.f32 %v1048, 1.0
        %v1050 = vrcp.pop %v1049
        %v1051 = vmul.f32 %v1049, %v1050
        %v1052 = vsub.f32 1.0, %v1051
        %v1053 = vmul.f32 %v1050, %v1052
        %v1054 = vadd.f32 %v1050, %v1053
        %vm1055 = vweird.f32 %v1049
        %vm1056 = vweird.f32 %v1050
        %vm1057 = vmor %vm1055, %vm1056
        %v1058 = vsel %vm1057, %v1050, %v1054
        %v1059 = vand.u32 2147483647, %v1049
        %vm1060 = vcmp.eq.f32.partialorder %v1059, 8.507059e+37
        %v1061 = vand.u32 %v1049, 2147483648
        %v1062 = vor.u32 1.1754944e-38, %v1061
        %v1063 = vsel %vm1060, %v1062, %v1058
        %v1064 = vmul.f32 1.0, %v1063
        %v1065 = vld [vmem:[#allocation3] sm:$0xff]
        %v1066 = vmul.f32 %v1044, %v1065
        %v1067 = vmul.f32 %v1025, %v1045
        %v1068 = vadd.f32 %v1066, %v1067
        %v1069 = vtanh.pop %v1068
        %v1070 = vmul.f32 %v1064, %v1069
        %v1071 = vstv %s843
        %vm1072 = vcmp.gt.s32.totalorder %v581, %v1071
        %v1073 = vsel %vm1072, 1, 0
        %1074 = vset.pattern.permute.xlu0 0
        %1075 = vperm.xlu0 %1074, %v1073
        %v1076 = vpop.permute.xlu0 %1075
        %vm1077 = vcmp.eq.s32.totalorder %v1076, 1
        %v1078 = vsel %vm1077, %v1070, %v844
        %1079 = vst [vmem:[#allocation2] sm:$0xff] %v1078
        %v1080 = vld [vmem:[#allocation3] sm:$0xff]
        %v1081 = vsel %vm1077, %v1068, %v1080
        %1082 = vst [vmem:[#allocation3] sm:$0xff] %v1081
        %v1083 = vsel %vm1077, %v1070, 0.0
        %s1084 = scalar_lea.vmem %s372, %s989 [#allocation11]
        %1085 = vst [vmem:[%s1084] sm:$0xff] %v1083
        %s1086 = ssub.s32 2, %s29
        %s1087 = sadd.s32 %s588, %s1086
        %v1088 = vld [vmem:[#allocation2] sm:$0xff]
        %v1089 = vld [vmem:[%s331] sm:$0xff]
        %v1090 = vld [vmem:[%s331 + $0x8] sm:$0xff]
        %v1091 = vld [vmem:[%s331 + $0x10] sm:$0xff]
        %v1092 = vld [vmem:[%s331 + $0x18] sm:$0xff]
        %v1093 = vld [vmem:[%s331 + $0x20] sm:$0xff]
        %v1094 = vld [vmem:[%s331 + $0x28] sm:$0xff]
        %v1095 = vld [vmem:[%s331 + $0x30] sm:$0xff]
        %v1096 = vld [vmem:[%s331 + $0x38] sm:$0xff]
        %v1097 = vld [vmem:[%s331 + $0x40] sm:$0xff]
        %v1098 = vld [vmem:[%s331 + $0x48] sm:$0xff]
        %v1099 = vld [vmem:[%s331 + $0x50] sm:$0xff]
        %v1100 = vld [vmem:[%s331 + $0x58] sm:$0xff]
        %v1101 = vld [vmem:[%s331 + $0x60] sm:$0xff]
        %v1102 = vld [vmem:[%s331 + $0x68] sm:$0xff]
        %v1103 = vld [vmem:[%s331 + $0x70] sm:$0xff]
        %v1104 = vld [vmem:[%s331 + $0x78] sm:$0xff]
        %v1105 = vld [vmem:[%s331 + $0x80] sm:$0xff]
        %v1106 = vld [vmem:[%s331 + $0x88] sm:$0xff]
        %v1107 = vld [vmem:[%s331 + $0x90] sm:$0xff]
        %v1108 = vld [vmem:[%s331 + $0x98] sm:$0xff]
        %v1109 = vld [vmem:[%s331 + $0xa0] sm:$0xff]
        %v1110 = vld [vmem:[%s331 + $0xa8] sm:$0xff]
        %v1111 = vld [vmem:[%s331 + $0xb0] sm:$0xff]
        %v1112 = vld [vmem:[%s331 + $0xb8] sm:$0xff]
        %v1113 = vld [vmem:[%s331 + $0xc0] sm:$0xff]
        %v1114 = vld [vmem:[%s331 + $0xc8] sm:$0xff]
        %v1115 = vld [vmem:[%s331 + $0xd0] sm:$0xff]
        %v1116 = vld [vmem:[%s331 + $0xd8] sm:$0xff]
        %v1117 = vld [vmem:[%s331 + $0xe0] sm:$0xff]
        %v1118 = vld [vmem:[%s331 + $0xe8] sm:$0xff]
        %v1119 = vld [vmem:[%s331 + $0xf0] sm:$0xff]
        %v1120 = vld [vmem:[%s331 + $0xf8] sm:$0xff]
        %v1121 = vld [vmem:[%s331 + $0x100] sm:$0xff]
        %v1122 = vld [vmem:[%s331 + $0x108] sm:$0xff]
        %v1123 = vld [vmem:[%s331 + $0x110] sm:$0xff]
        %v1124 = vld [vmem:[%s331 + $0x118] sm:$0xff]
        %v1125 = vld [vmem:[%s331 + $0x120] sm:$0xff]
        %v1126 = vld [vmem:[%s331 + $0x128] sm:$0xff]
        %v1127 = vld [vmem:[%s331 + $0x130] sm:$0xff]
        %v1128 = vld [vmem:[%s331 + $0x138] sm:$0xff]
        %v1129 = vld [vmem:[%s331 + $0x140] sm:$0xff]
        %v1130 = vld [vmem:[%s331 + $0x148] sm:$0xff]
        %v1131 = vld [vmem:[%s331 + $0x150] sm:$0xff]
        %v1132 = vld [vmem:[%s331 + $0x158] sm:$0xff]
        %v1133 = vld [vmem:[%s331 + $0x160] sm:$0xff]
        %v1134 = vld [vmem:[%s331 + $0x168] sm:$0xff]
        %v1135 = vld [vmem:[%s331 + $0x170] sm:$0xff]
        %v1136 = vld [vmem:[%s331 + $0x178] sm:$0xff]
        %v1137 = vld [vmem:[%s331 + $0x180] sm:$0xff]
        %v1138 = vld [vmem:[%s331 + $0x188] sm:$0xff]
        %v1139 = vld [vmem:[%s331 + $0x190] sm:$0xff]
        %v1140 = vld [vmem:[%s331 + $0x198] sm:$0xff]
        %v1141 = vld [vmem:[%s331 + $0x1a0] sm:$0xff]
        %v1142 = vld [vmem:[%s331 + $0x1a8] sm:$0xff]
        %v1143 = vld [vmem:[%s331 + $0x1b0] sm:$0xff]
        %v1144 = vld [vmem:[%s331 + $0x1b8] sm:$0xff]
        %v1145 = vld [vmem:[%s331 + $0x1c0] sm:$0xff]
        %v1146 = vld [vmem:[%s331 + $0x1c8] sm:$0xff]
        %v1147 = vld [vmem:[%s331 + $0x1d0] sm:$0xff]
        %v1148 = vld [vmem:[%s331 + $0x1d8] sm:$0xff]
        %v1149 = vld [vmem:[%s331 + $0x1e0] sm:$0xff]
        %v1150 = vld [vmem:[%s331 + $0x1e8] sm:$0xff]
        %v1151 = vld [vmem:[%s331 + $0x1f0] sm:$0xff]
        %v1152 = vld [vmem:[%s331 + $0x1f8] sm:$0xff]
        %1153 = vmatpush.msra.mxu0 %v1149
        %1154 = vmatpush.msra.mxu0 %v1145
        %1155 = vmatpush.msra.mxu0 %v1141
        %1156 = vmatpush.msra.mxu0 %v1137
        %1157 = vmatpush.msra.mxu0 %v1133
        %1158 = vmatpush.msra.mxu0 %v1129
        %1159 = vmatpush.msra.mxu0 %v1125
        %1160 = vmatpush.msra.mxu0 %v1121
        %1161 = vmatpush.msra.mxu0 %v1117
        %1162 = vmatpush.msra.mxu0 %v1113
        %1163 = vmatpush.msra.mxu0 %v1109
        %1164 = vmatpush.msra.mxu0 %v1105
        %1165 = vmatpush.msra.mxu0 %v1101
        %1166 = vmatpush.msra.mxu0 %v1097
        %1167 = vmatpush.msra.mxu0 %v1093
        %1168 = vmatpush.msra.mxu0 %v1089
        %1169 = vmatmul.f32.gmra.mxu0 %v1088
        %v1170 = vpop.f32.mrf.mxu0
        %v1171 = vadd.f32 0.0, %v1170
        %1172 = vdwg.mxu0
        %1173 = vmatpush.msra.mxu0 %v1150
        %1174 = vmatpush.msra.mxu0 %v1146
        %1175 = vmatpush.msra.mxu0 %v1142
        %1176 = vmatpush.msra.mxu0 %v1138
        %1177 = vmatpush.msra.mxu0 %v1134
        %1178 = vmatpush.msra.mxu0 %v1130
        %1179 = vmatpush.msra.mxu0 %v1126
        %1180 = vmatpush.msra.mxu0 %v1122
        %1181 = vmatpush.msra.mxu0 %v1118
        %1182 = vmatpush.msra.mxu0 %v1114
        %1183 = vmatpush.msra.mxu0 %v1110
        %1184 = vmatpush.msra.mxu0 %v1106
        %1185 = vmatpush.msra.mxu0 %v1102
        %1186 = vmatpush.msra.mxu0 %v1098
        %1187 = vmatpush.msra.mxu0 %v1094
        %1188 = vmatpush.msra.mxu0 %v1090
        %1189 = vmatmul.f32.gmra.mxu0 %v1088
        %v1190 = vpop.f32.mrf.mxu0
        %v1191 = vadd.f32 0.0, %v1190
        %1192 = vdwg.mxu0
        %1193 = vmatpush.msra.mxu0 %v1151
        %1194 = vmatpush.msra.mxu0 %v1147
        %1195 = vmatpush.msra.mxu0 %v1143
        %1196 = vmatpush.msra.mxu0 %v1139
        %1197 = vmatpush.msra.mxu0 %v1135
        %1198 = vmatpush.msra.mxu0 %v1131
        %1199 = vmatpush.msra.mxu0 %v1127
        %1200 = vmatpush.msra.mxu0 %v1123
        %1201 = vmatpush.msra.mxu0 %v1119
        %1202 = vmatpush.msra.mxu0 %v1115
        %1203 = vmatpush.msra.mxu0 %v1111
        %1204 = vmatpush.msra.mxu0 %v1107
        %1205 = vmatpush.msra.mxu0 %v1103
        %1206 = vmatpush.msra.mxu0 %v1099
        %1207 = vmatpush.msra.mxu0 %v1095
        %1208 = vmatpush.msra.mxu0 %v1091
        %1209 = vmatmul.f32.gmra.mxu0 %v1088
        %v1210 = vpop.f32.mrf.mxu0
        %v1211 = vadd.f32 0.0, %v1210
        %1212 = vdwg.mxu0
        %1213 = vmatpush.msra.mxu0 %v1152
        %1214 = vmatpush.msra.mxu0 %v1148
        %1215 = vmatpush.msra.mxu0 %v1144
        %1216 = vmatpush.msra.mxu0 %v1140
        %1217 = vmatpush.msra.mxu0 %v1136
        %1218 = vmatpush.msra.mxu0 %v1132
        %1219 = vmatpush.msra.mxu0 %v1128
        %1220 = vmatpush.msra.mxu0 %v1124
        %1221 = vmatpush.msra.mxu0 %v1120
        %1222 = vmatpush.msra.mxu0 %v1116
        %1223 = vmatpush.msra.mxu0 %v1112
        %1224 = vmatpush.msra.mxu0 %v1108
        %1225 = vmatpush.msra.mxu0 %v1104
        %1226 = vmatpush.msra.mxu0 %v1100
        %1227 = vmatpush.msra.mxu0 %v1096
        %1228 = vmatpush.msra.mxu0 %v1092
        %1229 = vmatmul.f32.gmra.mxu0 %v1088
        %v1230 = vpop.f32.mrf.mxu0
        %v1231 = vadd.f32 0.0, %v1230
        %1232 = vdwg.mxu0
        %s1233 = smul.u32 %s1086, 8
        %s1234 = sshra.s32 %s1233, 3
        %s1235 = sand.u32 %s1233, 7
        %s1236 = smul.u32 %s1234, 4
        %s1237 = smul.addr %s1236, 8
        %s1238 = scalar_lea.vmem [#allocation4], %s1237
        %v1239 = vld [vmem:[%s1238] sm:$0xff]
        %v1240 = vld [vmem:[%s1238 + $0x8] sm:$0xff]
        %v1241 = vld [vmem:[%s1238 + $0x10] sm:$0xff]
        %v1242 = vld [vmem:[%s1238 + $0x18] sm:$0xff]
        %v1243 = vadd.f32 %v1239, %v1171
        %v1244 = vadd.f32 %v1240, %v1191
        %v1245 = vadd.f32 %v1241, %v1211
        %v1246 = vadd.f32 %v1242, %v1231
        %v1247 = vadd.f32 %v1243, %v750
        %v1248 = vadd.f32 %v1244, %v751
        %v1249 = vadd.f32 %v1245, %v752
        %v1250 = vadd.f32 %v1246, %v753
        %v1251 = vxor.u32 %v1247, 2147483648
        %v1252 = vmul.f32 %v1251, 1.442695
        %v1253 = vpow.pop %v1252
        %v1254 = vadd.f32 %v1253, 1.0
        %v1255 = vrcp.pop %v1254
        %v1256 = vmul.f32 %v1254, %v1255
        %v1257 = vsub.f32 1.0, %v1256
        %v1258 = vmul.f32 %v1255, %v1257
        %v1259 = vadd.f32 %v1255, %v1258
        %vm1260 = vweird.f32 %v1254
        %vm1261 = vweird.f32 %v1255
        %vm1262 = vmor %vm1260, %vm1261
        %v1263 = vsel %vm1262, %v1255, %v1259
        %v1264 = vand.u32 2147483647, %v1254
        %vm1265 = vcmp.eq.f32.partialorder %v1264, 8.507059e+37
        %v1266 = vand.u32 %v1254, 2147483648
        %v1267 = vor.u32 1.1754944e-38, %v1266
        %v1268 = vsel %vm1265, %v1267, %v1263
        %v1269 = vmul.f32 1.0, %v1268
        %v1270 = vxor.u32 %v1248, 2147483648
        %v1271 = vmul.f32 %v1270, 1.442695
        %v1272 = vpow.pop %v1271
        %v1273 = vadd.f32 %v1272, 1.0
        %v1274 = vrcp.pop %v1273
        %v1275 = vmul.f32 %v1273, %v1274
        %v1276 = vsub.f32 1.0, %v1275
        %v1277 = vmul.f32 %v1274, %v1276
        %v1278 = vadd.f32 %v1274, %v1277
        %vm1279 = vweird.f32 %v1273
        %vm1280 = vweird.f32 %v1274
        %vm1281 = vmor %vm1279, %vm1280
        %v1282 = vsel %vm1281, %v1274, %v1278
        %v1283 = vand.u32 2147483647, %v1273
        %vm1284 = vcmp.eq.f32.partialorder %v1283, 8.507059e+37
        %v1285 = vand.u32 %v1273, 2147483648
        %v1286 = vor.u32 1.1754944e-38, %v1285
        %v1287 = vsel %vm1284, %v1286, %v1282
        %v1288 = vmul.f32 1.0, %v1287
        %v1289 = vtanh.pop %v1249
        %v1290 = vxor.u32 %v1250, 2147483648
        %v1291 = vmul.f32 %v1290, 1.442695
        %v1292 = vpow.pop %v1291
        %v1293 = vadd.f32 %v1292, 1.0
        %v1294 = vrcp.pop %v1293
        %v1295 = vmul.f32 %v1293, %v1294
        %v1296 = vsub.f32 1.0, %v1295
        %v1297 = vmul.f32 %v1294, %v1296
        %v1298 = vadd.f32 %v1294, %v1297
        %vm1299 = vweird.f32 %v1293
        %vm1300 = vweird.f32 %v1294
        %vm1301 = vmor %vm1299, %vm1300
        %v1302 = vsel %vm1301, %v1294, %v1298
        %v1303 = vand.u32 2147483647, %v1293
        %vm1304 = vcmp.eq.f32.partialorder %v1303, 8.507059e+37
        %v1305 = vand.u32 %v1293, 2147483648
        %v1306 = vor.u32 1.1754944e-38, %v1305
        %v1307 = vsel %vm1304, %v1306, %v1302
        %v1308 = vmul.f32 1.0, %v1307
        %v1309 = vld [vmem:[#allocation3] sm:$0xff]
        %v1310 = vmul.f32 %v1288, %v1309
        %v1311 = vmul.f32 %v1269, %v1289
        %v1312 = vadd.f32 %v1310, %v1311
        %v1313 = vtanh.pop %v1312
        %v1314 = vmul.f32 %v1308, %v1313
        %v1315 = vstv %s1087
        %vm1316 = vcmp.gt.s32.totalorder %v581, %v1315
        %v1317 = vsel %vm1316, 1, 0
        %1318 = vset.pattern.permute.xlu0 0
        %1319 = vperm.xlu0 %1318, %v1317
        %v1320 = vpop.permute.xlu0 %1319
        %vm1321 = vcmp.eq.s32.totalorder %v1320, 1
        %v1322 = vsel %vm1321, %v1314, %v1088
        %1323 = vst [vmem:[#allocation2] sm:$0xff] %v1322
        %v1324 = vld [vmem:[#allocation3] sm:$0xff]
        %v1325 = vsel %vm1321, %v1312, %v1324
        %1326 = vst [vmem:[#allocation3] sm:$0xff] %v1325
        %v1327 = vsel %vm1321, %v1314, 0.0
        %s1328 = scalar_lea.vmem %s372, %s1233 [#allocation11]
        %1329 = vst [vmem:[%s1328] sm:$0xff] %v1327
        %s1330 = smul.u32 %s29, 4294967293
        %s1331 = sadd.s32 %s1330, 3
        %s1332 = sadd.s32 %s588, %s1331
        %v1333 = vld [vmem:[#allocation2] sm:$0xff]
        %v1334 = vld [vmem:[%s331] sm:$0xff]
        %v1335 = vld [vmem:[%s331 + $0x8] sm:$0xff]
        %v1336 = vld [vmem:[%s331 + $0x10] sm:$0xff]
        %v1337 = vld [vmem:[%s331 + $0x18] sm:$0xff]
        %v1338 = vld [vmem:[%s331 + $0x20] sm:$0xff]
        %v1339 = vld [vmem:[%s331 + $0x28] sm:$0xff]
        %v1340 = vld [vmem:[%s331 + $0x30] sm:$0xff]
        %v1341 = vld [vmem:[%s331 + $0x38] sm:$0xff]
        %v1342 = vld [vmem:[%s331 + $0x40] sm:$0xff]
        %v1343 = vld [vmem:[%s331 + $0x48] sm:$0xff]
        %v1344 = vld [vmem:[%s331 + $0x50] sm:$0xff]
        %v1345 = vld [vmem:[%s331 + $0x58] sm:$0xff]
        %v1346 = vld [vmem:[%s331 + $0x60] sm:$0xff]
        %v1347 = vld [vmem:[%s331 + $0x68] sm:$0xff]
        %v1348 = vld [vmem:[%s331 + $0x70] sm:$0xff]
        %v1349 = vld [vmem:[%s331 + $0x78] sm:$0xff]
        %v1350 = vld [vmem:[%s331 + $0x80] sm:$0xff]
        %v1351 = vld [vmem:[%s331 + $0x88] sm:$0xff]
        %v1352 = vld [vmem:[%s331 + $0x90] sm:$0xff]
        %v1353 = vld [vmem:[%s331 + $0x98] sm:$0xff]
        %v1354 = vld [vmem:[%s331 + $0xa0] sm:$0xff]
        %v1355 = vld [vmem:[%s331 + $0xa8] sm:$0xff]
        %v1356 = vld [vmem:[%s331 + $0xb0] sm:$0xff]
        %v1357 = vld [vmem:[%s331 + $0xb8] sm:$0xff]
        %v1358 = vld [vmem:[%s331 + $0xc0] sm:$0xff]
        %v1359 = vld [vmem:[%s331 + $0xc8] sm:$0xff]
        %v1360 = vld [vmem:[%s331 + $0xd0] sm:$0xff]
        %v1361 = vld [vmem:[%s331 + $0xd8] sm:$0xff]
        %v1362 = vld [vmem:[%s331 + $0xe0] sm:$0xff]
        %v1363 = vld [vmem:[%s331 + $0xe8] sm:$0xff]
        %v1364 = vld [vmem:[%s331 + $0xf0] sm:$0xff]
        %v1365 = vld [vmem:[%s331 + $0xf8] sm:$0xff]
        %v1366 = vld [vmem:[%s331 + $0x100] sm:$0xff]
        %v1367 = vld [vmem:[%s331 + $0x108] sm:$0xff]
        %v1368 = vld [vmem:[%s331 + $0x110] sm:$0xff]
        %v1369 = vld [vmem:[%s331 + $0x118] sm:$0xff]
        %v1370 = vld [vmem:[%s331 + $0x120] sm:$0xff]
        %v1371 = vld [vmem:[%s331 + $0x128] sm:$0xff]
        %v1372 = vld [vmem:[%s331 + $0x130] sm:$0xff]
        %v1373 = vld [vmem:[%s331 + $0x138] sm:$0xff]
        %v1374 = vld [vmem:[%s331 + $0x140] sm:$0xff]
        %v1375 = vld [vmem:[%s331 + $0x148] sm:$0xff]
        %v1376 = vld [vmem:[%s331 + $0x150] sm:$0xff]
        %v1377 = vld [vmem:[%s331 + $0x158] sm:$0xff]
        %v1378 = vld [vmem:[%s331 + $0x160] sm:$0xff]
        %v1379 = vld [vmem:[%s331 + $0x168] sm:$0xff]
        %v1380 = vld [vmem:[%s331 + $0x170] sm:$0xff]
        %v1381 = vld [vmem:[%s331 + $0x178] sm:$0xff]
        %v1382 = vld [vmem:[%s331 + $0x180] sm:$0xff]
        %v1383 = vld [vmem:[%s331 + $0x188] sm:$0xff]
        %v1384 = vld [vmem:[%s331 + $0x190] sm:$0xff]
        %v1385 = vld [vmem:[%s331 + $0x198] sm:$0xff]
        %v1386 = vld [vmem:[%s331 + $0x1a0] sm:$0xff]
        %v1387 = vld [vmem:[%s331 + $0x1a8] sm:$0xff]
        %v1388 = vld [vmem:[%s331 + $0x1b0] sm:$0xff]
        %v1389 = vld [vmem:[%s331 + $0x1b8] sm:$0xff]
        %v1390 = vld [vmem:[%s331 + $0x1c0] sm:$0xff]
        %v1391 = vld [vmem:[%s331 + $0x1c8] sm:$0xff]
        %v1392 = vld [vmem:[%s331 + $0x1d0] sm:$0xff]
        %v1393 = vld [vmem:[%s331 + $0x1d8] sm:$0xff]
        %v1394 = vld [vmem:[%s331 + $0x1e0] sm:$0xff]
        %v1395 = vld [vmem:[%s331 + $0x1e8] sm:$0xff]
        %v1396 = vld [vmem:[%s331 + $0x1f0] sm:$0xff]
        %v1397 = vld [vmem:[%s331 + $0x1f8] sm:$0xff]
        %1398 = vmatpush.msra.mxu0 %v1394
        %1399 = vmatpush.msra.mxu0 %v1390
        %1400 = vmatpush.msra.mxu0 %v1386
        %1401 = vmatpush.msra.mxu0 %v1382
        %1402 = vmatpush.msra.mxu0 %v1378
        %1403 = vmatpush.msra.mxu0 %v1374
        %1404 = vmatpush.msra.mxu0 %v1370
        %1405 = vmatpush.msra.mxu0 %v1366
        %1406 = vmatpush.msra.mxu0 %v1362
        %1407 = vmatpush.msra.mxu0 %v1358
        %1408 = vmatpush.msra.mxu0 %v1354
        %1409 = vmatpush.msra.mxu0 %v1350
        %1410 = vmatpush.msra.mxu0 %v1346
        %1411 = vmatpush.msra.mxu0 %v1342
        %1412 = vmatpush.msra.mxu0 %v1338
        %1413 = vmatpush.msra.mxu0 %v1334
        %1414 = vmatmul.f32.gmra.mxu0 %v1333
        %v1415 = vpop.f32.mrf.mxu0
        %v1416 = vadd.f32 0.0, %v1415
        %1417 = vdwg.mxu0
        %1418 = vmatpush.msra.mxu0 %v1395
        %1419 = vmatpush.msra.mxu0 %v1391
        %1420 = vmatpush.msra.mxu0 %v1387
        %1421 = vmatpush.msra.mxu0 %v1383
        %1422 = vmatpush.msra.mxu0 %v1379
        %1423 = vmatpush.msra.mxu0 %v1375
        %1424 = vmatpush.msra.mxu0 %v1371
        %1425 = vmatpush.msra.mxu0 %v1367
        %1426 = vmatpush.msra.mxu0 %v1363
        %1427 = vmatpush.msra.mxu0 %v1359
        %1428 = vmatpush.msra.mxu0 %v1355
        %1429 = vmatpush.msra.mxu0 %v1351
        %1430 = vmatpush.msra.mxu0 %v1347
        %1431 = vmatpush.msra.mxu0 %v1343
        %1432 = vmatpush.msra.mxu0 %v1339
        %1433 = vmatpush.msra.mxu0 %v1335
        %1434 = vmatmul.f32.gmra.mxu0 %v1333
        %v1435 = vpop.f32.mrf.mxu0
        %v1436 = vadd.f32 0.0, %v1435
        %1437 = vdwg.mxu0
        %1438 = vmatpush.msra.mxu0 %v1396
        %1439 = vmatpush.msra.mxu0 %v1392
        %1440 = vmatpush.msra.mxu0 %v1388
        %1441 = vmatpush.msra.mxu0 %v1384
        %1442 = vmatpush.msra.mxu0 %v1380
        %1443 = vmatpush.msra.mxu0 %v1376
        %1444 = vmatpush.msra.mxu0 %v1372
        %1445 = vmatpush.msra.mxu0 %v1368
        %1446 = vmatpush.msra.mxu0 %v1364
        %1447 = vmatpush.msra.mxu0 %v1360
        %1448 = vmatpush.msra.mxu0 %v1356
        %1449 = vmatpush.msra.mxu0 %v1352
        %1450 = vmatpush.msra.mxu0 %v1348
        %1451 = vmatpush.msra.mxu0 %v1344
        %1452 = vmatpush.msra.mxu0 %v1340
        %1453 = vmatpush.msra.mxu0 %v1336
        %1454 = vmatmul.f32.gmra.mxu0 %v1333
        %v1455 = vpop.f32.mrf.mxu0
        %v1456 = vadd.f32 0.0, %v1455
        %1457 = vdwg.mxu0
        %1458 = vmatpush.msra.mxu0 %v1397
        %1459 = vmatpush.msra.mxu0 %v1393
        %1460 = vmatpush.msra.mxu0 %v1389
        %1461 = vmatpush.msra.mxu0 %v1385
        %1462 = vmatpush.msra.mxu0 %v1381
        %1463 = vmatpush.msra.mxu0 %v1377
        %1464 = vmatpush.msra.mxu0 %v1373
        %1465 = vmatpush.msra.mxu0 %v1369
        %1466 = vmatpush.msra.mxu0 %v1365
        %1467 = vmatpush.msra.mxu0 %v1361
        %1468 = vmatpush.msra.mxu0 %v1357
        %1469 = vmatpush.msra.mxu0 %v1353
        %1470 = vmatpush.msra.mxu0 %v1349
        %1471 = vmatpush.msra.mxu0 %v1345
        %1472 = vmatpush.msra.mxu0 %v1341
        %1473 = vmatpush.msra.mxu0 %v1337
        %1474 = vmatmul.f32.gmra.mxu0 %v1333
        %v1475 = vpop.f32.mrf.mxu0
        %v1476 = vadd.f32 0.0, %v1475
        %1477 = vdwg.mxu0
        %s1478 = smul.u32 %s1331, 8
        %s1479 = sshra.s32 %s1478, 3
        %s1480 = sand.u32 %s1478, 7
        %s1481 = smul.u32 %s1479, 4
        %s1482 = smul.addr %s1481, 8
        %s1483 = scalar_lea.vmem [#allocation4], %s1482
        %v1484 = vld [vmem:[%s1483] sm:$0xff]
        %v1485 = vld [vmem:[%s1483 + $0x8] sm:$0xff]
        %v1486 = vld [vmem:[%s1483 + $0x10] sm:$0xff]
        %v1487 = vld [vmem:[%s1483 + $0x18] sm:$0xff]
        %v1488 = vadd.f32 %v1484, %v1416
        %v1489 = vadd.f32 %v1485, %v1436
        %v1490 = vadd.f32 %v1486, %v1456
        %v1491 = vadd.f32 %v1487, %v1476
        %v1492 = vadd.f32 %v1488, %v750
        %v1493 = vadd.f32 %v1489, %v751
        %v1494 = vadd.f32 %v1490, %v752
        %v1495 = vadd.f32 %v1491, %v753
        %v1496 = vxor.u32 %v1492, 2147483648
        %v1497 = vmul.f32 %v1496, 1.442695
        %v1498 = vpow.pop %v1497
        %v1499 = vadd.f32 %v1498, 1.0
        %v1500 = vrcp.pop %v1499
        %v1501 = vmul.f32 %v1499, %v1500
        %v1502 = vsub.f32 1.0, %v1501
        %v1503 = vmul.f32 %v1500, %v1502
        %v1504 = vadd.f32 %v1500, %v1503
        %vm1505 = vweird.f32 %v1499
        %vm1506 = vweird.f32 %v1500
        %vm1507 = vmor %vm1505, %vm1506
        %v1508 = vsel %vm1507, %v1500, %v1504
        %v1509 = vand.u32 2147483647, %v1499
        %vm1510 = vcmp.eq.f32.partialorder %v1509, 8.507059e+37
        %v1511 = vand.u32 %v1499, 2147483648
        %v1512 = vor.u32 1.1754944e-38, %v1511
        %v1513 = vsel %vm1510, %v1512, %v1508
        %v1514 = vmul.f32 1.0, %v1513
        %v1515 = vxor.u32 %v1493, 2147483648
        %v1516 = vmul.f32 %v1515, 1.442695
        %v1517 = vpow.pop %v1516
        %v1518 = vadd.f32 %v1517, 1.0
        %v1519 = vrcp.pop %v1518
        %v1520 = vmul.f32 %v1518, %v1519
        %v1521 = vsub.f32 1.0, %v1520
        %v1522 = vmul.f32 %v1519, %v1521
        %v1523 = vadd.f32 %v1519, %v1522
        %vm1524 = vweird.f32 %v1518
        %vm1525 = vweird.f32 %v1519
        %vm1526 = vmor %vm1524, %vm1525
        %v1527 = vsel %vm1526, %v1519, %v1523
        %v1528 = vand.u32 2147483647, %v1518
        %vm1529 = vcmp.eq.f32.partialorder %v1528, 8.507059e+37
        %v1530 = vand.u32 %v1518, 2147483648
        %v1531 = vor.u32 1.1754944e-38, %v1530
        %v1532 = vsel %vm1529, %v1531, %v1527
        %v1533 = vmul.f32 1.0, %v1532
        %v1534 = vtanh.pop %v1494
        %v1535 = vxor.u32 %v1495, 2147483648
        %v1536 = vmul.f32 %v1535, 1.442695
        %v1537 = vpow.pop %v1536
        %v1538 = vadd.f32 %v1537, 1.0
        %v1539 = vrcp.pop %v1538
        %v1540 = vmul.f32 %v1538, %v1539
        %v1541 = vsub.f32 1.0, %v1540
        %v1542 = vmul.f32 %v1539, %v1541
        %v1543 = vadd.f32 %v1539, %v1542
        %vm1544 = vweird.f32 %v1538
        %vm1545 = vweird.f32 %v1539
        %vm1546 = vmor %vm1544, %vm1545
        %v1547 = vsel %vm1546, %v1539, %v1543
        %v1548 = vand.u32 2147483647, %v1538
        %vm1549 = vcmp.eq.f32.partialorder %v1548, 8.507059e+37
        %v1550 = vand.u32 %v1538, 2147483648
        %v1551 = vor.u32 1.1754944e-38, %v1550
        %v1552 = vsel %vm1549, %v1551, %v1547
        %v1553 = vmul.f32 1.0, %v1552
        %v1554 = vld [vmem:[#allocation3] sm:$0xff]
        %v1555 = vmul.f32 %v1533, %v1554
        %v1556 = vmul.f32 %v1514, %v1534
        %v1557 = vadd.f32 %v1555, %v1556
        %v1558 = vtanh.pop %v1557
        %v1559 = vmul.f32 %v1553, %v1558
        %v1560 = vstv %s1332
        %vm1561 = vcmp.gt.s32.totalorder %v581, %v1560
        %v1562 = vsel %vm1561, 1, 0
        %1563 = vset.pattern.permute.xlu0 0
        %1564 = vperm.xlu0 %1563, %v1562
        %v1565 = vpop.permute.xlu0 %1564
        %vm1566 = vcmp.eq.s32.totalorder %v1565, 1
        %v1567 = vsel %vm1566, %v1559, %v1333
        %1568 = vst [vmem:[#allocation2] sm:$0xff] %v1567
        %v1569 = vld [vmem:[#allocation3] sm:$0xff]
        %v1570 = vsel %vm1566, %v1557, %v1569
        %1571 = vst [vmem:[#allocation3] sm:$0xff] %v1570
        %v1572 = vsel %vm1566, %v1559, 0.0
        %s1573 = scalar_lea.vmem %s372, %s1478 [#allocation11]
        %1574 = vst [vmem:[%s1573] sm:$0xff] %v1572
        %s1575 = sand.u32 %s188, 1
        %s1576 = scalar_lea.sflag [#allocation7], %s1575
        %s1577 = sand.u32 %s188, 1
        %s1578 = smul.addr %s1577, 32
        %s1579 = scalar_lea.vmem [#allocation11], %s1578
        // Predicated region
        $region57: #{tpu_custom_call.1} parent=39 // pred_check
          %p1580 = pneg %p198
        $region58: #{tpu_custom_call.1} parent=39 // pred_check_branch
          %1582 = sbr.rel (%p1580) target = $region60
        $region59: #{tpu_custom_call.1} parent=39 // pred_region
          %s1583 = smul.u32 %s30, 2
          %s1584 = ssub.s32 3, %s1583
          %s1585 = smul.u32 %s29, %s1584
          %s1586 = sadd.s32 %s30, %s1585
          %s1587 = smul.u32 4, %s1586
          %1589 = vsyncadd %s1576, 0
          %s1590 = smul.addr %s1587, 2
          %s1591 = sadd.s32 %s29, %s1590
          %s1592 = smul.addr %s1591, 8
          %s1593 = scalar_lea.hbm %s5, %s1592
          %s1594 = sshll.u32 %s1579, 4
          %s1595 = int_to_ptr.vmem [resolvable:$true] %s1594
          %s1596 = sshll.u32 %s1593, 4
          %s1597 = int_to_ptr.hbm [resolvable:$true] %s1596
          %1602 = dma.vmem_to_hbm [thread:$0]  %s1595, 512, %s1597, %s1576, 128, 256, 8
        $region60: #{tpu_custom_call.1} parent=39 // pred_fallthru
          _
      $region40: #{tpu_custom_call.1} parent=5 // pred_fallthru
        _
      %p1603 = scmp.le.s32.totalorder 2, %s20
      // Predicated region
      $region61: #{tpu_custom_call.1} parent=5 // pred_check
        %p1604 = pneg %p1603
      $region62: #{tpu_custom_call.1} parent=5 // pred_check_branch
        %1606 = sbr.rel (%p1604) target = $region64
      $region63: #{tpu_custom_call.1} parent=5 // pred_region
        %s1607 = ssub.s32 %s20, 2
        // Predicated region
        $region65: #{tpu_custom_call.1} parent=63 // pred_check
          %p1608 = pneg %p204
        $region66: #{tpu_custom_call.1} parent=63 // pred_check_branch
          %1610 = sbr.rel (%p1608) target = $region68
        $region67: #{tpu_custom_call.1} parent=63 // pred_region
          %s1611 = sand.u32 %s189, 1
          %s1612 = scalar_lea.sflag [#allocation7], %s1611
          %s1613 = sand.u32 %s189, 1
          %s1614 = smul.addr %s1613, 32
          %s1615 = scalar_lea.vmem [#allocation11], %s1614
          %1617 = dma.done %s1612, 512
        $region68: #{tpu_custom_call.1} parent=63 // pred_fallthru
          _
      $region64: #{tpu_custom_call.1} parent=5 // pred_fallthru
        _
    $region6: #{tpu_custom_call.1} parent=1 // loop_footer
      %s24 = sadd.s32 1, %s20
    $region7: #{tpu_custom_call.1} parent=1 // loop_footer_branch
      %19 = sbr.rel target = $region3
    $region8: #{tpu_custom_call.1} parent=1 // loop_exit
      _
    %1618 = vsyncpa [#allocation6], 1
    %s1619 = scalar_lea.sflag [#allocation6], 1
    %1620 = vsyncpa %s1619, 1
    %1621 = vsyncpa [#allocation9], 1
    %s1622 = scalar_lea.sflag [#allocation9], 1
    %1623 = vsyncpa %s1622, 1
    %1624 = vsyncpa [#allocation7], 1
    %s1625 = scalar_lea.sflag [#allocation7], 1
    %1626 = vsyncpa %s1625, 1

</llo_original>
